<compile_context>
chip_gen: v7x
topology: tpu7x:2x2x1
jax: 0.10.0
libtpu: 0.0.40
codegen_flags: <defaults>
</compile_context>

<pallas_src>
import functools

import jax
import jax.numpy as jnp
from jax import lax
from jax.experimental import pallas as pl
from jax.experimental.pallas import tpu as pltpu

BN_EPS = 1e-5


# ----------------------------------------------------------------------------
# Fused kernel: one grid step per (image, output-row tile).
#   refs (has_expand=True):  x, we, be, wd, bd, wp, bp, out, hpad_scratch
#   refs (has_expand=False): x, wd, bd, wp, bp, out, hpad_scratch
# x is host-padded: (H+2, W_p, c_in_p) with zero spatial border and zero
# channel padding; all BN scales are folded into we/wd/wp, only shifts stream.
# ----------------------------------------------------------------------------
def _fused_kernel(*refs, stride, th, W, use_res, has_expand,
                  mxu_dtype, compute_dtype, bottom_pad):
    if has_expand:
        (x_ref, we_ref, be_ref, wd_ref, bd_ref, wp_ref, bp_ref,
         o_ref, hpad_ref) = refs
    else:
        (x_ref, wd_ref, bd_ref, wp_ref, bp_ref, o_ref, hpad_ref) = refs
        we_ref = be_ref = None

    _, W_p, c_in_p = x_ref.shape           # padded input block
    _, w_out, c_out_p = o_ref.shape        # (th, w_out, c_out_p)
    th_in, _, hid_p = hpad_ref.shape

    t = pl.program_id(1)
    n_tiles = pl.num_programs(1)
    row_step = th * stride
    in_row0 = t * row_step                  # first padded-x row of this tile
    if row_step % 8 == 0:
        in_row0 = pl.multiple_of(in_row0, 8)

    # ---- expand 1x1 conv (+BN shift + ReLU6) straight into the VMEM tile ----
    xin = x_ref[pl.ds(in_row0, th_in), :, :]            # (th_in, W_p, c_in_p)
    if has_expand:
        h = jnp.dot(xin.reshape(th_in * W_p, c_in_p).astype(mxu_dtype),
                    we_ref[...],                         # bf16 (c_in_p, hid_p)
                    preferred_element_type=jnp.float32)
        h = jnp.clip(h + be_ref[...], 0.0, 6.0).reshape(th_in, W_p, hid_p)
        hpad_ref[...] = h.astype(compute_dtype)
        # The 3x3's zero padding lives in *hidden* space; the BN shift makes
        # expand(0) != 0, so re-zero exactly the pad positions the 3x3 reads.
        zcol = jnp.zeros((th_in, 1, hid_p), compute_dtype)
        hpad_ref[:, 0:1, :] = zcol
        hpad_ref[:, W + 1:W + 2, :] = zcol

        @pl.when(t == 0)
        def _():
            hpad_ref[0:1, :, :] = jnp.zeros((1, W_p, hid_p), compute_dtype)

        if bottom_pad:
            @pl.when(t == n_tiles - 1)
            def _():
                hpad_ref[th_in - 1:th_in, :, :] = jnp.zeros(
                    (1, W_p, hid_p), compute_dtype)
    else:
        # expand_ratio == 1: hidden == input; x's host-side zero pad already
        # is the correct depthwise padding.
        hpad_ref[...] = xin.astype(compute_dtype)

    # ---- depthwise 3x3 (+BN shift + ReLU6) ----
    wd = wd_ref[...]                         # (9, hid_p) f32, BN-scaled taps
    h_span = (th - 1) * stride + 1
    w_span = (w_out - 1) * stride + 1
    acc = None
    for dy in range(3):
        slab = hpad_ref[pl.ds(dy, h_span), :, :]         # contiguous rows
        if stride > 1:
            slab = lax.slice(slab, (0, 0, 0), (h_span, W_p, hid_p),
                             (stride, 1, 1))             # pick strided rows
        slab = slab.astype(jnp.float32)                  # (th, W_p, hid_p)
        for dx in range(3):
            if stride == 1:
                win = lax.slice(slab, (0, dx, 0), (th, dx + w_out, hid_p))
            else:
                win = lax.slice(slab, (0, dx, 0), (th, dx + w_span, hid_p),
                                (1, stride, 1))
            term = win * wd[3 * dy + dx, :]
            acc = term if acc is None else acc + term
    acc = jnp.clip(acc + bd_ref[...], 0.0, 6.0)          # (th, w_out, hid_p)

    # ---- projection 1x1 conv (+BN shift), optional residual, store ----
    # NOTE: th*w_out is kept a multiple of 8 by the wrapper's tile choice for
    # the test shapes; non-multiple w_out may force a relayout copy here.
    y = jnp.dot(acc.reshape(th * w_out, hid_p).astype(mxu_dtype),
                wp_ref[...],                              # bf16 (hid_p, c_out_p)
                preferred_element_type=jnp.float32)
    y = (y + bp_ref[...]).reshape(th, w_out, c_out_p)
    if use_res:                              # stride==1 and c_in==c_out
        res = x_ref[pl.ds(in_row0 + 1, th), pl.ds(1, W), :]
        y = y + res.astype(jnp.float32)
    o_ref[...] = y.astype(o_ref.dtype)       # full 128-lane (unmasked) store


# ----------------------------------------------------------------------------
# Host-side glue
# ----------------------------------------------------------------------------
def _bn_fold(gamma, beta, mean, var):
    scale = gamma / jnp.sqrt(var + BN_EPS)
    shift = beta - mean * scale
    return scale, shift


def _round_up(x, m):
    return (x + m - 1) // m * m


def _pad_last(a, axes_sizes):
    """Zero-pad trailing axes of `a` up to the given sizes (dict axis->size)."""
    pads = [(0, 0)] * a.ndim
    for ax, size in axes_sizes.items():
        pads[ax] = (0, size - a.shape[ax])
    return jnp.pad(a, pads)


def _pick_row_tile(h_out, w_out, hid_p, acc_budget_bytes=128 * 1024):
    """Pick th | h_out with th*w_out >= 128 if possible, acc tile <= budget."""
    mem_cap = max(1, acc_budget_bytes // (w_out * hid_p * 4))
    want = -(-128 // w_out)                       # ceil(128 / w_out)
    upper = max(1, min(h_out, mem_cap))
    divs = [d for d in range(1, h_out + 1) if h_out % d == 0 and d <= upper]
    geq = [d for d in divs if d >= want]
    return min(geq) if geq else max(divs)         # th=1 only for prime h_out


def inverted_residual_forward(x_nchw, params, *, c_in, c_out, stride,
                              expand_ratio, lane=128,
                              mxu_dtype=jnp.bfloat16,
                              compute_dtype=jnp.float32):
    hidden = int(c_in * expand_ratio)
    use_res = (stride == 1) and (c_in == c_out)
    has_expand = expand_ratio != 1

    N, _, H, W = x_nchw.shape
    h_out = (H - 1) // stride + 1                 # k=3, pad=1
    w_out = (W - 1) // stride + 1

    c_in_p = _round_up(c_in, lane)
    hid_p = _round_up(hidden, lane)
    c_out_p = _round_up(c_out, lane)
    W_p = _round_up(W + 2, 8)                     # 1px border + sublane align

    # NHWC + spatial (1px) / alignment / channel zero padding in one pad op.
    x = jnp.transpose(x_nchw, (0, 2, 3, 1))
    x = jnp.pad(x, ((0, 0), (1, 1), (1, W_p - W - 1), (0, c_in_p - c_in)))

    th = _pick_row_tile(h_out, w_out, hid_p)
    th_in = (th - 1) * stride + 3
    n_tiles = h_out // th

    # Fold BN scales into conv weights (host side, tiny), pad to 128 lanes.
    s2, b2 = _bn_fold(*params["bn2"])
    wd = params["w_dw"] * s2[None, None, :]
    wd = _pad_last(wd, {2: hid_p}).reshape(9, hid_p).astype(jnp.float32)
    bd = _pad_last(b2, {0: hid_p})[None, :].astype(jnp.float32)

    s3, b3 = _bn_fold(*params["bn3"])
    wp = params["w_proj"] * s3[None, :]
    wp = _pad_last(wp, {0: hid_p, 1: c_out_p}).astype(mxu_dtype)
    bp = _pad_last(b3, {0: c_out_p})[None, :].astype(jnp.float32)

    in_specs = [pl.BlockSpec((None, H + 2, W_p, c_in_p),
                             lambda n, t: (n, 0, 0, 0))]
    args = [x]
    if has_expand:
        s1, b1 = _bn_fold(*params["bn1"])
        we = params["w_expand"] * s1[None, :]
        we = _pad_last(we, {0: c_in_p, 1: hid_p}).astype(mxu_dtype)
        be = _pad_last(b1, {0: hid_p})[None, :].astype(jnp.float32)
        in_specs += [pl.BlockSpec((c_in_p, hid_p), lambda n, t: (0, 0)),
                     pl.BlockSpec((1, hid_p), lambda n, t: (0, 0))]
        args += [we, be]
    in_specs += [pl.BlockSpec((9, hid_p), lambda n, t: (0, 0)),
                 pl.BlockSpec((1, hid_p), lambda n, t: (0, 0)),
                 pl.BlockSpec((hid_p, c_out_p), lambda n, t: (0, 0)),
                 pl.BlockSpec((1, c_out_p), lambda n, t: (0, 0))]
    args += [wd, bd, wp, bp]

    kern = functools.partial(
        _fused_kernel, stride=stride, th=th, W=W, use_res=use_res,
        has_expand=has_expand, mxu_dtype=mxu_dtype, compute_dtype=compute_dtype,
        bottom_pad=((h_out - 1) * stride == H - 1))

    out = pl.pallas_call(
        kern,
        out_shape=jax.ShapeDtypeStruct((N, h_out, w_out, c_out_p),
                                       x_nchw.dtype),
        grid_spec=pltpu.PrefetchScalarGridSpec(
            num_scalar_prefetch=0,
            grid=(N, n_tiles),
            in_specs=in_specs,
            out_specs=pl.BlockSpec((None, th, w_out, c_out_p),
                                   lambda n, t: (n, t, 0, 0)),
            scratch_shapes=[pltpu.VMEM((th_in, W_p, hid_p), compute_dtype)],
        ),
        # VMEM footprint here is ~1 MiB, well under every chip's scoped limit;
        # at real MobileNetV2 sizes re-derive th for v7x's 64 MiB budget.
        compiler_params=pltpu.CompilerParams(
            dimension_semantics=("parallel", "parallel")),
    )(*args)

    out = out[..., :c_out]                        # drop lane padding
    return jnp.transpose(out, (0, 3, 1, 2))       # -> NCHW


def init_params(key, c_in, c_out, expand_ratio):
    hidden = int(c_in * expand_ratio)
    ks = jax.random.split(key, 16)

    def bn(k0, k1, k2, k3, c):
        return (jax.random.uniform(ks[k0], (c,), minval=0.5, maxval=1.5),
                jax.random.normal(ks[k1], (c,)) * 0.1,
                jax.random.normal(ks[k2], (c,)) * 0.1,
                jax.random.uniform(ks[k3], (c,), minval=0.5, maxval=1.5))

    p = {}
    if expand_ratio != 1:
        p["w_expand"] = jax.random.normal(ks[0], (c_in, hidden), jnp.float32) * 0.1
        p["bn1"] = bn(1, 2, 3, 4, hidden)
    p["w_dw"] = jax.random.normal(ks[5], (3, 3, hidden), jnp.float32) * 0.1
    p["bn2"] = bn(6, 7, 8, 9, hidden)
    p["w_proj"] = jax.random.normal(ks[10], (hidden, c_out), jnp.float32) * 0.1
    p["bn3"] = bn(11, 12, 13, 14, c_out)
    return p


# Pure-JAX fp32 reference (lax convs) for correctness checking.
def reference_forward(x_nchw, params, *, c_in, c_out, stride, expand_ratio):
    hidden = int(c_in * expand_ratio)
    x = jnp.transpose(x_nchw, (0, 2, 3, 1))
    h = x
    dn = ("NHWC", "HWIO", "NHWC")
    if expand_ratio != 1:
        s1, b1 = _bn_fold(*params["bn1"])
        h = lax.conv_general_dilated(h, params["w_expand"][None, None],
                                     (1, 1), "VALID", dimension_numbers=dn)
        h = jnp.clip(h * s1 + b1, 0.0, 6.0)
    s2, b2 = _bn_fold(*params["bn2"])
    h = lax.conv_general_dilated(h, params["w_dw"][:, :, None, :],
                                 (stride, stride), ((1, 1), (1, 1)),
                                 dimension_numbers=dn,
                                 feature_group_count=hidden)
    h = jnp.clip(h * s2 + b2, 0.0, 6.0)
    s3, b3 = _bn_fold(*params["bn3"])
    h = lax.conv_general_dilated(h, params["w_proj"][None, None],
                                 (1, 1), "VALID", dimension_numbers=dn)
    h = h * s3 + b3
    if stride == 1 and c_in == c_out:
        h = h + x
    return jnp.transpose(h, (0, 3, 1, 2))


if __name__ == "__main__":
    key = jax.random.PRNGKey(0)
    N = 2
    configs = [
        # (c_in, c_out, H, W, stride, expand_ratio)
        (8, 8, 16, 16, 1, 4),    # residual path, with expansion (primary)
        (8, 16, 16, 16, 2, 4),   # strided, no residual
        (16, 16, 16, 16, 1, 1),  # expand_ratio == 1 path, residual
    ]
    for idx, (c_in, c_out, H, W, stride, expand) in enumerate(configs):
        kx, kp, key = jax.random.split(key, 3)
        x = jax.random.normal(kx, (N, c_in, H, W), jnp.float32)
        params = init_params(kp, c_in, c_out, expand)

        out = inverted_residual_forward(
            x, params, c_in=c_in, c_out=c_out, stride=stride,
            expand_ratio=expand)
        out = jax.block_until_ready(out)

        ref = reference_forward(
            x, params, c_in=c_in, c_out=c_out, stride=stride,
            expand_ratio=expand)
        ref = jax.block_until_ready(ref)

        h_out = (H - 1) // stride + 1
        w_out = (W - 1) // stride + 1
        assert out.shape == (N, c_out, h_out, w_out), f"shape mismatch cfg {idx}"
        # bf16 MXU operands (fp32 accumulation) shift numerics slightly vs the
        # fp32 reference -> tolerance chosen for bf16 inference precision.
        assert jnp.allclose(out, ref, atol=5e-2, rtol=5e-2), \
            f"numerical mismatch vs reference, cfg {idx}"
    print("KERNEL_OK")
</pallas_src>

<mosaic_0001>
module attributes {stable_mosaic.version = 11 : i64} {
  func.func @_fused_kernel(%arg0: i32, %arg1: i32, %arg2: memref<1x18x24x128xf32, #tpu.memory_space<vmem>>, %arg3: memref<128x128xbf16, #tpu.memory_space<vmem>>, %arg4: memref<1x128xf32, #tpu.memory_space<vmem>>, %arg5: memref<9x128xf32, #tpu.memory_space<vmem>>, %arg6: memref<1x128xf32, #tpu.memory_space<vmem>>, %arg7: memref<128x128xbf16, #tpu.memory_space<vmem>>, %arg8: memref<1x128xf32, #tpu.memory_space<vmem>>, %arg9: memref<1x8x16x128xf32, #tpu.memory_space<vmem>>, %arg10: memref<10x24x128xf32, #tpu.memory_space<vmem>>) attributes {dimension_semantics = [#tpu.dimension_semantics<parallel>, #tpu.dimension_semantics<parallel>], iteration_bounds = array<i64: 2, 2>, scalar_prefetch = 0 : i64, scratch_operands = 1 : i64, tpu.core_type = #tpu.core_type<tc>, window_params = [{transform_indices = @transform_0, window_bounds = array<i64: 1, 18, 24, 128>}, {pipeline_mode = #tpu.pipeline_mode<synchronous>, transform_indices = @transform_1, window_bounds = array<i64: 128, 128>}, {pipeline_mode = #tpu.pipeline_mode<synchronous>, transform_indices = @transform_2, window_bounds = array<i64: 1, 128>}, {pipeline_mode = #tpu.pipeline_mode<synchronous>, transform_indices = @transform_3, window_bounds = array<i64: 9, 128>}, {pipeline_mode = #tpu.pipeline_mode<synchronous>, transform_indices = @transform_4, window_bounds = array<i64: 1, 128>}, {pipeline_mode = #tpu.pipeline_mode<synchronous>, transform_indices = @transform_5, window_bounds = array<i64: 128, 128>}, {pipeline_mode = #tpu.pipeline_mode<synchronous>, transform_indices = @transform_6, window_bounds = array<i64: 1, 128>}, {transform_indices = @transform_7, window_bounds = array<i64: 1, 8, 16, 128>}]} {
    %c8_i32 = arith.constant 8 : i32
    %0 = arith.muli %arg1, %c8_i32 : i32
    %1 = tpu.assume_multiple %0, 8 : i32
    %c0 = arith.constant 0 : index
    %2 = arith.index_cast %1 : i32 to index
    %c0_0 = arith.constant 0 : index
    %c0_1 = arith.constant 0 : index
    %3 = vector.load %arg2[%c0, %2, %c0_0, %c0_1] : memref<1x18x24x128xf32, #tpu.memory_space<vmem>>, vector<1x10x24x128xf32>
    %4 = vector.shape_cast %3 : vector<1x10x24x128xf32> to vector<10x24x128xf32>
    %5 = vector.shape_cast %4 : vector<10x24x128xf32> to vector<240x128xf32>
    %6 = arith.truncf %5 : vector<240x128xf32> to vector<240x128xbf16>
    %c0_2 = arith.constant 0 : index
    %c0_3 = arith.constant 0 : index
    %7 = vector.load %arg3[%c0_2, %c0_3] : memref<128x128xbf16, #tpu.memory_space<vmem>>, vector<128x128xbf16>
    %cst = arith.constant dense<0.000000e+00> : vector<240x128xf32>
    %8 = tpu.matmul %6, %7, %cst {dimension_numbers = #tpu.dot_dimension_numbers<[1], [0], [0], [1], [0, 0, 1, 1], [], []>} : vector<240x128xbf16>, vector<128x128xbf16>, vector<240x128xf32> -> vector<240x128xf32>
    %c0_4 = arith.constant 0 : index
    %c0_5 = arith.constant 0 : index
    %9 = vector.load %arg4[%c0_4, %c0_5] : memref<1x128xf32, #tpu.memory_space<vmem>>, vector<1x128xf32>
    %10 = vector.broadcast %9 : vector<1x128xf32> to vector<240x128xf32>
    %11 = arith.addf %8, %10 : vector<240x128xf32>
    %cst_6 = arith.constant 0.000000e+00 : f32
    %cst_7 = arith.constant 6.000000e+00 : f32
    %12 = vector.broadcast %cst_6 : f32 to vector<240x128xf32>
    %13 = arith.maximumf %12, %11 : vector<240x128xf32>
    %14 = vector.broadcast %cst_7 : f32 to vector<240x128xf32>
    %15 = arith.minimumf %14, %13 : vector<240x128xf32>
    %16 = vector.shape_cast %15 : vector<240x128xf32> to vector<10x24x128xf32>
    %c0_8 = arith.constant 0 : index
    %c0_9 = arith.constant 0 : index
    %c0_10 = arith.constant 0 : index
    %17 = vector.load %arg10[%c0_8, %c0_9, %c0_10] : memref<10x24x128xf32, #tpu.memory_space<vmem>>, vector<10x24x128xf32>
    tpu.vector_store %arg10[%c0_8, %c0_9, %c0_10], %16 {strides = array<i32>} : memref<10x24x128xf32, #tpu.memory_space<vmem>>, vector<10x24x128xf32>,
    %cst_11 = arith.constant 0.000000e+00 : f32
    %18 = vector.broadcast %cst_11 : f32 to vector<10x1x128xf32>
    %c0_12 = arith.constant 0 : index
    %c0_13 = arith.constant 0 : index
    %c0_14 = arith.constant 0 : index
    %19 = vector.load %arg10[%c0_12, %c0_13, %c0_14] : memref<10x24x128xf32, #tpu.memory_space<vmem>>, vector<10x1x128xf32>
    tpu.vector_store %arg10[%c0_12, %c0_13, %c0_14], %18 {strides = array<i32>} : memref<10x24x128xf32, #tpu.memory_space<vmem>>, vector<10x1x128xf32>,
    %c0_15 = arith.constant 0 : index
    %c17 = arith.constant 17 : index
    %c0_16 = arith.constant 0 : index
    %20 = vector.load %arg10[%c0_15, %c17, %c0_16] : memref<10x24x128xf32, #tpu.memory_space<vmem>>, vector<10x1x128xf32>
    tpu.vector_store %arg10[%c0_15, %c17, %c0_16], %18 {strides = array<i32>} : memref<10x24x128xf32, #tpu.memory_space<vmem>>, vector<10x1x128xf32>,
    %c0_i32 = arith.constant 0 : i32
    %21 = arith.cmpi eq, %arg1, %c0_i32 : i32
    %22 = arith.extui %21 : i1 to i32
    %c0_i32_17 = arith.constant 0 : i32
    %23 = arith.cmpi ne, %22, %c0_i32_17 : i32
    scf.if %23 {
      %cst_45 = arith.constant 0.000000e+00 : f32
      %117 = vector.broadcast %cst_45 : f32 to vector<1x24x128xf32>
      %c0_46 = arith.constant 0 : index
      %c0_47 = arith.constant 0 : index
      %c0_48 = arith.constant 0 : index
      %118 = vector.load %arg10[%c0_46, %c0_47, %c0_48] : memref<10x24x128xf32, #tpu.memory_space<vmem>>, vector<1x24x128xf32>
      tpu.vector_store %arg10[%c0_46, %c0_47, %c0_48], %117 {strides = array<i32>} : memref<10x24x128xf32, #tpu.memory_space<vmem>>, vector<1x24x128xf32>,
    } else {
    }
    %c1_i32 = arith.constant 1 : i32
    %24 = arith.cmpi eq, %arg1, %c1_i32 : i32
    %25 = arith.extui %24 : i1 to i32
    %c0_i32_18 = arith.constant 0 : i32
    %26 = arith.cmpi ne, %25, %c0_i32_18 : i32
    scf.if %26 {
      %cst_45 = arith.constant 0.000000e+00 : f32
      %117 = vector.broadcast %cst_45 : f32 to vector<1x24x128xf32>
      %c9 = arith.constant 9 : index
      %c0_46 = arith.constant 0 : index
      %c0_47 = arith.constant 0 : index
      %118 = vector.load %arg10[%c9, %c0_46, %c0_47] : memref<10x24x128xf32, #tpu.memory_space<vmem>>, vector<1x24x128xf32>
      tpu.vector_store %arg10[%c9, %c0_46, %c0_47], %117 {strides = array<i32>} : memref<10x24x128xf32, #tpu.memory_space<vmem>>, vector<1x24x128xf32>,
    } else {
    }
    %c0_19 = arith.constant 0 : index
    %c0_20 = arith.constant 0 : index
    %27 = vector.load %arg5[%c0_19, %c0_20] : memref<9x128xf32, #tpu.memory_space<vmem>>, vector<9x128xf32>
    %c0_21 = arith.constant 0 : index
    %c0_22 = arith.constant 0 : index
    %c0_23 = arith.constant 0 : index
    %28 = vector.load %arg10[%c0_21, %c0_22, %c0_23] : memref<10x24x128xf32, #tpu.memory_space<vmem>>, vector<8x24x128xf32>
    %29 = vector.extract_strided_slice %28 {offsets = [0, 0, 0], sizes = [8, 16, 128], strides = [1, 1, 1]} : vector<8x24x128xf32> to vector<8x16x128xf32>
    %30 = vector.extract_strided_slice %27 {offsets = [0, 0], sizes = [1, 128], strides = [1, 1]} : vector<9x128xf32> to vector<1x128xf32>
    %31 = vector.shape_cast %30 : vector<1x128xf32> to vector<128xf32>
    %32 = vector.shape_cast %31 : vector<128xf32> to vector<1x1x128xf32>
    %33 = vector.broadcast %32 : vector<1x1x128xf32> to vector<8x16x128xf32>
    %34 = arith.mulf %29, %33 : vector<8x16x128xf32>
    %35 = vector.extract_strided_slice %28 {offsets = [0, 1, 0], sizes = [8, 16, 128], strides = [1, 1, 1]} : vector<8x24x128xf32> to vector<8x16x128xf32>
    %36 = vector.extract_strided_slice %27 {offsets = [1, 0], sizes = [1, 128], strides = [1, 1]} : vector<9x128xf32> to vector<1x128xf32>
    %37 = vector.shape_cast %36 : vector<1x128xf32> to vector<128xf32>
    %38 = vector.shape_cast %37 : vector<128xf32> to vector<1x1x128xf32>
    %39 = vector.broadcast %38 : vector<1x1x128xf32> to vector<8x16x128xf32>
    %40 = arith.mulf %35, %39 : vector<8x16x128xf32>
    %41 = arith.addf %34, %40 : vector<8x16x128xf32>
    %42 = vector.extract_strided_slice %28 {offsets = [0, 2, 0], sizes = [8, 16, 128], strides = [1, 1, 1]} : vector<8x24x128xf32> to vector<8x16x128xf32>
    %43 = vector.extract_strided_slice %27 {offsets = [2, 0], sizes = [1, 128], strides = [1, 1]} : vector<9x128xf32> to vector<1x128xf32>
    %44 = vector.shape_cast %43 : vector<1x128xf32> to vector<128xf32>
    %45 = vector.shape_cast %44 : vector<128xf32> to vector<1x1x128xf32>
    %46 = vector.broadcast %45 : vector<1x1x128xf32> to vector<8x16x128xf32>
    %47 = arith.mulf %42, %46 : vector<8x16x128xf32>
    %48 = arith.addf %41, %47 : vector<8x16x128xf32>
    %c1 = arith.constant 1 : index
    %c0_24 = arith.constant 0 : index
    %c0_25 = arith.constant 0 : index
    %49 = vector.load %arg10[%c1, %c0_24, %c0_25] : memref<10x24x128xf32, #tpu.memory_space<vmem>>, vector<8x24x128xf32>
    %50 = vector.extract_strided_slice %49 {offsets = [0, 0, 0], sizes = [8, 16, 128], strides = [1, 1, 1]} : vector<8x24x128xf32> to vector<8x16x128xf32>
    %51 = vector.extract_strided_slice %27 {offsets = [3, 0], sizes = [1, 128], strides = [1, 1]} : vector<9x128xf32> to vector<1x128xf32>
    %52 = vector.shape_cast %51 : vector<1x128xf32> to vector<128xf32>
    %53 = vector.shape_cast %52 : vector<128xf32> to vector<1x1x128xf32>
    %54 = vector.broadcast %53 : vector<1x1x128xf32> to vector<8x16x128xf32>
    %55 = arith.mulf %50, %54 : vector<8x16x128xf32>
    %56 = arith.addf %48, %55 : vector<8x16x128xf32>
    %57 = vector.extract_strided_slice %49 {offsets = [0, 1, 0], sizes = [8, 16, 128], strides = [1, 1, 1]} : vector<8x24x128xf32> to vector<8x16x128xf32>
    %58 = vector.extract_strided_slice %27 {offsets = [4, 0], sizes = [1, 128], strides = [1, 1]} : vector<9x128xf32> to vector<1x128xf32>
    %59 = vector.shape_cast %58 : vector<1x128xf32> to vector<128xf32>
    %60 = vector.shape_cast %59 : vector<128xf32> to vector<1x1x128xf32>
    %61 = vector.broadcast %60 : vector<1x1x128xf32> to vector<8x16x128xf32>
    %62 = arith.mulf %57, %61 : vector<8x16x128xf32>
    %63 = arith.addf %56, %62 : vector<8x16x128xf32>
    %64 = vector.extract_strided_slice %49 {offsets = [0, 2, 0], sizes = [8, 16, 128], strides = [1, 1, 1]} : vector<8x24x128xf32> to vector<8x16x128xf32>
    %65 = vector.extract_strided_slice %27 {offsets = [5, 0], sizes = [1, 128], strides = [1, 1]} : vector<9x128xf32> to vector<1x128xf32>
    %66 = vector.shape_cast %65 : vector<1x128xf32> to vector<128xf32>
    %67 = vector.shape_cast %66 : vector<128xf32> to vector<1x1x128xf32>
    %68 = vector.broadcast %67 : vector<1x1x128xf32> to vector<8x16x128xf32>
    %69 = arith.mulf %64, %68 : vector<8x16x128xf32>
    %70 = arith.addf %63, %69 : vector<8x16x128xf32>
    %c2 = arith.constant 2 : index
    %c0_26 = arith.constant 0 : index
    %c0_27 = arith.constant 0 : index
    %71 = vector.load %arg10[%c2, %c0_26, %c0_27] : memref<10x24x128xf32, #tpu.memory_space<vmem>>, vector<8x24x128xf32>
    %72 = vector.extract_strided_slice %71 {offsets = [0, 0, 0], sizes = [8, 16, 128], strides = [1, 1, 1]} : vector<8x24x128xf32> to vector<8x16x128xf32>
    %73 = vector.extract_strided_slice %27 {offsets = [6, 0], sizes = [1, 128], strides = [1, 1]} : vector<9x128xf32> to vector<1x128xf32>
    %74 = vector.shape_cast %73 : vector<1x128xf32> to vector<128xf32>
    %75 = vector.shape_cast %74 : vector<128xf32> to vector<1x1x128xf32>
    %76 = vector.broadcast %75 : vector<1x1x128xf32> to vector<8x16x128xf32>
    %77 = arith.mulf %72, %76 : vector<8x16x128xf32>
    %78 = arith.addf %70, %77 : vector<8x16x128xf32>
    %79 = vector.extract_strided_slice %71 {offsets = [0, 1, 0], sizes = [8, 16, 128], strides = [1, 1, 1]} : vector<8x24x128xf32> to vector<8x16x128xf32>
    %80 = vector.extract_strided_slice %27 {offsets = [7, 0], sizes = [1, 128], strides = [1, 1]} : vector<9x128xf32> to vector<1x128xf32>
    %81 = vector.shape_cast %80 : vector<1x128xf32> to vector<128xf32>
    %82 = vector.shape_cast %81 : vector<128xf32> to vector<1x1x128xf32>
    %83 = vector.broadcast %82 : vector<1x1x128xf32> to vector<8x16x128xf32>
    %84 = arith.mulf %79, %83 : vector<8x16x128xf32>
    %85 = arith.addf %78, %84 : vector<8x16x128xf32>
    %86 = vector.extract_strided_slice %71 {offsets = [0, 2, 0], sizes = [8, 16, 128], strides = [1, 1, 1]} : vector<8x24x128xf32> to vector<8x16x128xf32>
    %87 = vector.extract_strided_slice %27 {offsets = [8, 0], sizes = [1, 128], strides = [1, 1]} : vector<9x128xf32> to vector<1x128xf32>
    %88 = vector.shape_cast %87 : vector<1x128xf32> to vector<128xf32>
    %89 = vector.shape_cast %88 : vector<128xf32> to vector<1x1x128xf32>
    %90 = vector.broadcast %89 : vector<1x1x128xf32> to vector<8x16x128xf32>
    %91 = arith.mulf %86, %90 : vector<8x16x128xf32>
    %92 = arith.addf %85, %91 : vector<8x16x128xf32>
    %c0_28 = arith.constant 0 : index
    %c0_29 = arith.constant 0 : index
    %93 = vector.load %arg6[%c0_28, %c0_29] : memref<1x128xf32, #tpu.memory_space<vmem>>, vector<1x128xf32>
    %94 = vector.shape_cast %93 : vector<1x128xf32> to vector<1x1x128xf32>
    %95 = vector.broadcast %94 : vector<1x1x128xf32> to vector<8x16x128xf32>
    %96 = arith.addf %92, %95 : vector<8x16x128xf32>
    %cst_30 = arith.constant 0.000000e+00 : f32
    %cst_31 = arith.constant 6.000000e+00 : f32
    %97 = vector.broadcast %cst_30 : f32 to vector<8x16x128xf32>
    %98 = arith.maximumf %97, %96 : vector<8x16x128xf32>
    %99 = vector.broadcast %cst_31 : f32 to vector<8x16x128xf32>
    %100 = arith.minimumf %99, %98 : vector<8x16x128xf32>
    %101 = vector.shape_cast %100 : vector<8x16x128xf32> to vector<128x128xf32>
    %102 = arith.truncf %101 : vector<128x128xf32> to vector<128x128xbf16>
    %c0_32 = arith.constant 0 : index
    %c0_33 = arith.constant 0 : index
    %103 = vector.load %arg7[%c0_32, %c0_33] : memref<128x128xbf16, #tpu.memory_space<vmem>>, vector<128x128xbf16>
    %cst_34 = arith.constant dense<0.000000e+00> : vector<128x128xf32>
    %104 = tpu.matmul %102, %103, %cst_34 {dimension_numbers = #tpu.dot_dimension_numbers<[1], [0], [0], [1], [0, 0, 1, 1], [], []>} : vector<128x128xbf16>, vector<128x128xbf16>, vector<128x128xf32> -> vector<128x128xf32>
    %c0_35 = arith.constant 0 : index
    %c0_36 = arith.constant 0 : index
    %105 = vector.load %arg8[%c0_35, %c0_36] : memref<1x128xf32, #tpu.memory_space<vmem>>, vector<1x128xf32>
    %106 = vector.broadcast %105 : vector<1x128xf32> to vector<128x128xf32>
    %107 = arith.addf %104, %106 : vector<128x128xf32>
    %108 = vector.shape_cast %107 : vector<128x128xf32> to vector<8x16x128xf32>
    %c1_i32_37 = arith.constant 1 : i32
    %109 = arith.addi %1, %c1_i32_37 : i32
    %c0_38 = arith.constant 0 : index
    %110 = arith.index_cast %109 : i32 to index
    %c1_39 = arith.constant 1 : index
    %c0_40 = arith.constant 0 : index
    %111 = vector.load %arg2[%c0_38, %110, %c1_39, %c0_40] : memref<1x18x24x128xf32, #tpu.memory_space<vmem>>, vector<1x8x16x128xf32>
    %112 = vector.shape_cast %111 : vector<1x8x16x128xf32> to vector<8x16x128xf32>
    %113 = arith.addf %108, %112 : vector<8x16x128xf32>
    %c0_41 = arith.constant 0 : index
    %c0_42 = arith.constant 0 : index
    %c0_43 = arith.constant 0 : index
    %c0_44 = arith.constant 0 : index
    %114 = vector.load %arg9[%c0_41, %c0_42, %c0_43, %c0_44] : memref<1x8x16x128xf32, #tpu.memory_space<vmem>>, vector<1x8x16x128xf32>
    %115 = vector.shape_cast %114 : vector<1x8x16x128xf32> to vector<8x16x128xf32>
    %116 = vector.shape_cast %113 : vector<8x16x128xf32> to vector<1x8x16x128xf32>
    tpu.vector_store %arg9[%c0_41, %c0_42, %c0_43, %c0_44], %116 {strides = array<i32>} : memref<1x8x16x128xf32, #tpu.memory_space<vmem>>, vector<1x8x16x128xf32>,
    return
  }
  func.func @transform_0(%arg0: i32, %arg1: i32) -> (i32, i32, i32, i32) {
    %c0_i32 = arith.constant 0 : i32
    %c0_i32_0 = arith.constant 0 : i32
    %c0_i32_1 = arith.constant 0 : i32
    %c0_i32_2 = arith.constant 0 : i32
    return %arg0, %c0_i32, %c0_i32_0, %c0_i32_1 : i32, i32, i32, i32
  }
  func.func @transform_1(%arg0: i32, %arg1: i32) -> (i32, i32) {
    %c0_i32 = arith.constant 0 : i32
    %c0_i32_0 = arith.constant 0 : i32
    %c0_i32_1 = arith.constant 0 : i32
    return %c0_i32, %c0_i32_0 : i32, i32
  }
  func.func @transform_2(%arg0: i32, %arg1: i32) -> (i32, i32) {
    %c0_i32 = arith.constant 0 : i32
    %c0_i32_0 = arith.constant 0 : i32
    %c0_i32_1 = arith.constant 0 : i32
    return %c0_i32, %c0_i32_0 : i32, i32
  }
  func.func @transform_3(%arg0: i32, %arg1: i32) -> (i32, i32) {
    %c0_i32 = arith.constant 0 : i32
    %c0_i32_0 = arith.constant 0 : i32
    %c0_i32_1 = arith.constant 0 : i32
    return %c0_i32, %c0_i32_0 : i32, i32
  }
  func.func @transform_4(%arg0: i32, %arg1: i32) -> (i32, i32) {
    %c0_i32 = arith.constant 0 : i32
    %c0_i32_0 = arith.constant 0 : i32
    %c0_i32_1 = arith.constant 0 : i32
    return %c0_i32, %c0_i32_0 : i32, i32
  }
  func.func @transform_5(%arg0: i32, %arg1: i32) -> (i32, i32) {
    %c0_i32 = arith.constant 0 : i32
    %c0_i32_0 = arith.constant 0 : i32
    %c0_i32_1 = arith.constant 0 : i32
    return %c0_i32, %c0_i32_0 : i32, i32
  }
  func.func @transform_6(%arg0: i32, %arg1: i32) -> (i32, i32) {
    %c0_i32 = arith.constant 0 : i32
    %c0_i32_0 = arith.constant 0 : i32
    %c0_i32_1 = arith.constant 0 : i32
    return %c0_i32, %c0_i32_0 : i32, i32
  }
  func.func @transform_7(%arg0: i32, %arg1: i32) -> (i32, i32, i32, i32) {
    %c0_i32 = arith.constant 0 : i32
    %c0_i32_0 = arith.constant 0 : i32
    %c0_i32_1 = arith.constant 0 : i32
    return %arg0, %arg1, %c0_i32, %c0_i32_0 : i32, i32, i32, i32
  }
}

</mosaic_0001>

<llo_original>
// kernel: tpu_custom_call.1
$region0: #{tpu_custom_call.1}
  #allocation0 [shape = 'u32[]', space=smem, size = 0x4, offset = 0x4, fixed_abs, tag = 'smem constant byte address 0x4 - core index']
  #allocation1 [shape = 'u32[144,128]{1,0:T(1,128)}', space=vmem, size = 0x12000, scoped, tag = 'internal scratch']
  #allocation2 [shape = 'f32[10,24,128]{2,1,0:T(8,128)}', space=vmem, size = 0x1e000, scoped, tag = 'scratch operand']
  %s0 = inlined_call_operand.hbm [shape: f32[2,18,24,128], index: 0, kind: input, shape index: {}]
  %s1 = inlined_call_operand.hbm [shape: bf16[128,128], index: 1, kind: input, shape index: {}]
  %s2 = inlined_call_operand.vmem [shape: f32[1,128], index: 2, kind: input, shape index: {}]
  %s3 = inlined_call_operand.hbm [shape: f32[9,128], index: 3, kind: input, shape index: {}]
  %s4 = inlined_call_operand.vmem [shape: f32[1,128], index: 4, kind: input, shape index: {}]
  %s5 = inlined_call_operand.hbm [shape: bf16[128,128], index: 5, kind: input, shape index: {}]
  %s6 = inlined_call_operand.vmem [shape: f32[1,128], index: 6, kind: input, shape index: {}]
  %s7 = inlined_call_operand.hbm [shape: f32[2,16,16,128], index: 7, kind: output, shape index: {}]
  %s8 = sld [smem:[#allocation0]]
  $region85: #{tpu_custom_call.1} parent=0
    _
  %s10 = ssub.s32 1, %s8
  %s11 = scalar_select 0, %s10, %s8
  $region1: #{tpu_custom_call.1} parent=0
    #allocation3 [shape = 'u8[442368]{0}', space=vmem, size = 0x6c000, scoped, tag = 'input window, operand 0']
    #allocation4 [shape = 's32[2]{0}', space=sflag, size = 0x8, scoped, tag = 'scoped memory for tpu_custom_call.1']
    #allocation5 [shape = 's32[2]{0}', space=sflag, size = 0x8, scoped, tag = 'scoped memory for tpu_custom_call.1']
    #allocation6 [shape = 'u8[32768]{0}', space=vmem, size = 0x8000, scoped, tag = 'input window, operand 1, single buffered']
    #allocation7 [shape = 's32[1]{0}', space=sflag, size = 0x4, scoped, tag = 'scoped memory for tpu_custom_call.1']
    #allocation8 [shape = 'u8[8192]{0}', space=vmem, size = 0x2000, scoped, tag = 'input window, operand 3, single buffered']
    #allocation9 [shape = 'u8[32768]{0}', space=vmem, size = 0x8000, scoped, tag = 'input window, operand 5, single buffered']
    #allocation10 [shape = 's32[1]{0}', space=sflag, size = 0x4, scoped, tag = 'scoped memory for tpu_custom_call.1']
    #allocation11 [shape = 'u8[131072]{0}', space=vmem, size = 0x20000, scoped, tag = 'output window, operand 0']
    %12 = vsyncpa [#allocation4], 0
    %s13 = scalar_lea.sflag [#allocation4], 1
    %14 = vsyncpa %s13, 0
    %15 = vsyncpa [#allocation7], 0
    %16 = vsyncpa [#allocation10], 0
    %17 = vsyncpa [#allocation5], 0
    %s18 = scalar_lea.sflag [#allocation5], 1
    %19 = vsyncpa %s18, 0
    loop: start=0, step=1, limit=6
    $region2: #{tpu_custom_call.1} parent=1 // loop_pre_header
      _
    $region3: #{tpu_custom_call.1} parent=1 // loop_header
      %s21 = sphi 0, %s25
      %p22 = scmp.ge.s32.totalorder %s21, 6
      %s28 = sphi 0, %s40
      %s29 = sphi 0, %s36
      %s30 = sphi 0, %s28
      %s31 = sphi 0, %s29
      %s32 = sphi 0, %s30
      %s33 = sphi 0, %s31
      %s43 = sphi 0, %s45
      %s46 = sphi 0, %s43
      %s47 = sphi 0, %s46
      %s63 = sphi 0, %s47
      %s67 = sphi 0, %s67
      %s69 = sphi 0, %s67
      %s70 = sphi 0, %s69
      %s84 = sphi 0, %s70
      %s88 = sphi 0, %s88
      %s90 = sphi 0, %s88
      %s91 = sphi 0, %s90
      %s105 = sphi 0, %s91
      %s109 = sphi 0, %s109
      %s111 = sphi 0, %s109
      %s112 = sphi 0, %s111
      %s126 = sphi 0, %s112
      %s130 = sphi 0, %s130
      %s132 = sphi 0, %s130
      %s133 = sphi 0, %s132
      %s147 = sphi 0, %s133
      %s151 = sphi 0, %s151
      %s153 = sphi 0, %s151
      %s154 = sphi 0, %s153
      %s168 = sphi 0, %s154
      %s172 = sphi 0, %s172
      %s174 = sphi 0, %s172
      %s175 = sphi 0, %s174
      %s189 = sphi 0, %s175
      %s197 = sphi 0, %s199
      %s200 = sphi 0, %s197
      %s201 = sphi 0, %s200
      %s217 = sphi 0, %s201
    $region4: #{tpu_custom_call.1} parent=1 // loop_header_branch
      %24 = sbr.rel (%p22) target = $region8
    $region5: #{tpu_custom_call.1} parent=1 // loop_body
      %s26 = ssub.s32 %s21, 1
      %s27 = ssub.s32 %s21, 2
      %s34 = sadd.s32 1, %s29
      %p35 = scmp.ge.s32.totalorder %s34, 2
      %s36 = scalar_select %p35, 0, %s34
      %s37 = sadd.s32 1, %s28
      %s38 = scalar_select %p35, %s37, %s28
      %p39 = scmp.ge.s32.totalorder %s38, 2
      %s40 = scalar_select %p39, 0, %s38
      %s41 = ssub.s32 %s28, %s40
      %p42 = scmp.eq.s32.totalorder %s41, 0
      %s44 = sadd.s32 %s43, 1
      %s45 = scalar_select %p42, %s43, %s44
      %p48 = pneg %p42
      %p49 = scmp.eq.s32.totalorder %s21, 3
      %p50 = por %p48, %p49
      %p51 = scmp.ne.s32.totalorder %s43, %s46
      %p52 = scmp.eq.s32.totalorder %s21, 0
      %p53 = por %p51, %p52
      %p54 = scmp.ne.s32.totalorder %s43, %s46
      %p55 = scmp.eq.s32.totalorder %s26, 3
      %p56 = por %p54, %p55
      %p57 = scmp.ne.s32.totalorder %s46, %s47
      %p58 = scmp.eq.s32.totalorder %s26, 0
      %p59 = por %p57, %p58
      %p60 = scmp.ne.s32.totalorder %s46, %s47
      %p61 = scmp.eq.s32.totalorder %s27, 3
      %p62 = por %p60, %p61
      %p64 = scmp.ne.s32.totalorder %s47, %s63
      %p65 = scmp.eq.s32.totalorder %s27, 0
      %p66 = por %p64, %p65
      %s68 = sadd.s32 %s67, 1
      %p71 = scmp.eq.s32.totalorder %s21, 3
      %p72 = scmp.ne.s32.totalorder %s67, %s69
      %p73 = scmp.eq.s32.totalorder %s21, 0
      %p74 = por %p72, %p73
      %p75 = scmp.ne.s32.totalorder %s67, %s69
      %p76 = scmp.eq.s32.totalorder %s26, 3
      %p77 = por %p75, %p76
      %p78 = scmp.ne.s32.totalorder %s69, %s70
      %p79 = scmp.eq.s32.totalorder %s26, 0
      %p80 = por %p78, %p79
      %p81 = scmp.ne.s32.totalorder %s69, %s70
      %p82 = scmp.eq.s32.totalorder %s27, 3
      %p83 = por %p81, %p82
      %p85 = scmp.ne.s32.totalorder %s70, %s84
      %p86 = scmp.eq.s32.totalorder %s27, 0
      %p87 = por %p85, %p86
      %s89 = sadd.s32 %s88, 1
      %p92 = scmp.eq.s32.totalorder %s21, 3
      %p93 = scmp.ne.s32.totalorder %s88, %s90
      %p94 = scmp.eq.s32.totalorder %s21, 0
      %p95 = por %p93, %p94
      %p96 = scmp.ne.s32.totalorder %s88, %s90
      %p97 = scmp.eq.s32.totalorder %s26, 3
      %p98 = por %p96, %p97
      %p99 = scmp.ne.s32.totalorder %s90, %s91
      %p100 = scmp.eq.s32.totalorder %s26, 0
      %p101 = por %p99, %p100
      %p102 = scmp.ne.s32.totalorder %s90, %s91
      %p103 = scmp.eq.s32.totalorder %s27, 3
      %p104 = por %p102, %p103
      %p106 = scmp.ne.s32.totalorder %s91, %s105
      %p107 = scmp.eq.s32.totalorder %s27, 0
      %p108 = por %p106, %p107
      %s110 = sadd.s32 %s109, 1
      %p113 = scmp.eq.s32.totalorder %s21, 3
      %p114 = scmp.ne.s32.totalorder %s109, %s111
      %p115 = scmp.eq.s32.totalorder %s21, 0
      %p116 = por %p114, %p115
      %p117 = scmp.ne.s32.totalorder %s109, %s111
      %p118 = scmp.eq.s32.totalorder %s26, 3
      %p119 = por %p117, %p118
      %p120 = scmp.ne.s32.totalorder %s111, %s112
      %p121 = scmp.eq.s32.totalorder %s26, 0
      %p122 = por %p120, %p121
      %p123 = scmp.ne.s32.totalorder %s111, %s112
      %p124 = scmp.eq.s32.totalorder %s27, 3
      %p125 = por %p123, %p124
      %p127 = scmp.ne.s32.totalorder %s112, %s126
      %p128 = scmp.eq.s32.totalorder %s27, 0
      %p129 = por %p127, %p128
      %s131 = sadd.s32 %s130, 1
      %p134 = scmp.eq.s32.totalorder %s21, 3
      %p135 = scmp.ne.s32.totalorder %s130, %s132
      %p136 = scmp.eq.s32.totalorder %s21, 0
      %p137 = por %p135, %p136
      %p138 = scmp.ne.s32.totalorder %s130, %s132
      %p139 = scmp.eq.s32.totalorder %s26, 3
      %p140 = por %p138, %p139
      %p141 = scmp.ne.s32.totalorder %s132, %s133
      %p142 = scmp.eq.s32.totalorder %s26, 0
      %p143 = por %p141, %p142
      %p144 = scmp.ne.s32.totalorder %s132, %s133
      %p145 = scmp.eq.s32.totalorder %s27, 3
      %p146 = por %p144, %p145
      %p148 = scmp.ne.s32.totalorder %s133, %s147
      %p149 = scmp.eq.s32.totalorder %s27, 0
      %p150 = por %p148, %p149
      %s152 = sadd.s32 %s151, 1
      %p155 = scmp.eq.s32.totalorder %s21, 3
      %p156 = scmp.ne.s32.totalorder %s151, %s153
      %p157 = scmp.eq.s32.totalorder %s21, 0
      %p158 = por %p156, %p157
      %p159 = scmp.ne.s32.totalorder %s151, %s153
      %p160 = scmp.eq.s32.totalorder %s26, 3
      %p161 = por %p159, %p160
      %p162 = scmp.ne.s32.totalorder %s153, %s154
      %p163 = scmp.eq.s32.totalorder %s26, 0
      %p164 = por %p162, %p163
      %p165 = scmp.ne.s32.totalorder %s153, %s154
      %p166 = scmp.eq.s32.totalorder %s27, 3
      %p167 = por %p165, %p166
      %p169 = scmp.ne.s32.totalorder %s154, %s168
      %p170 = scmp.eq.s32.totalorder %s27, 0
      %p171 = por %p169, %p170
      %s173 = sadd.s32 %s172, 1
      %p176 = scmp.eq.s32.totalorder %s21, 3
      %p177 = scmp.ne.s32.totalorder %s172, %s174
      %p178 = scmp.eq.s32.totalorder %s21, 0
      %p179 = por %p177, %p178
      %p180 = scmp.ne.s32.totalorder %s172, %s174
      %p181 = scmp.eq.s32.totalorder %s26, 3
      %p182 = por %p180, %p181
      %p183 = scmp.ne.s32.totalorder %s174, %s175
      %p184 = scmp.eq.s32.totalorder %s26, 0
      %p185 = por %p183, %p184
      %p186 = scmp.ne.s32.totalorder %s174, %s175
      %p187 = scmp.eq.s32.totalorder %s27, 3
      %p188 = por %p186, %p187
      %p190 = scmp.ne.s32.totalorder %s175, %s189
      %p191 = scmp.eq.s32.totalorder %s27, 0
      %p192 = por %p190, %p191
      %s193 = ssub.s32 %s28, %s40
      %s194 = ssub.s32 %s29, %s36
      %s195 = sor.u32 %s193, %s194
      %p196 = scmp.eq.s32.totalorder %s195, 0
      %s198 = sadd.s32 %s197, 1
      %s199 = scalar_select %p196, %s197, %s198
      %p202 = pneg %p196
      %p203 = scmp.eq.s32.totalorder %s21, 3
      %p204 = por %p202, %p203
      %p205 = scmp.ne.s32.totalorder %s197, %s200
      %p206 = scmp.eq.s32.totalorder %s21, 0
      %p207 = por %p205, %p206
      %p208 = scmp.ne.s32.totalorder %s197, %s200
      %p209 = scmp.eq.s32.totalorder %s26, 3
      %p210 = por %p208, %p209
      %p211 = scmp.ne.s32.totalorder %s200, %s201
      %p212 = scmp.eq.s32.totalorder %s26, 0
      %p213 = por %p211, %p212
      %p214 = scmp.ne.s32.totalorder %s200, %s201
      %p215 = scmp.eq.s32.totalorder %s27, 3
      %p216 = por %p214, %p215
      %p218 = scmp.ne.s32.totalorder %s201, %s217
      %p219 = scmp.eq.s32.totalorder %s27, 0
      %p220 = por %p218, %p219
      %p221 = scmp.le.s32.totalorder 1, %s21
      %p222 = scmp.lt.s32.totalorder %s21, 5
      %p223 = pnand %p221, %p222
      %p224 = pneg %p223
      // Predicated region
      $region9: #{tpu_custom_call.1} parent=5 // pred_check
        _
      $region10: #{tpu_custom_call.1} parent=5 // pred_check_branch
        %226 = sbr.rel (%p223) target = $region12
      $region11: #{tpu_custom_call.1} parent=5 // pred_region
        %s227 = ssub.s32 %s21, 1
        // Predicated region
        $region13: #{tpu_custom_call.1} parent=11 // pred_check
          %p228 = pneg %p80
        $region14: #{tpu_custom_call.1} parent=11 // pred_check_branch
          %230 = sbr.rel (%p228) target = $region16
        $region15: #{tpu_custom_call.1} parent=11 // pred_region
          %s232 = ssub.s32 1024, 1024
          %233 = vsyncadd [#allocation7], %s232
          %s234 = sshll.u32 [#allocation6], 4
          %s235 = int_to_ptr.vmem [resolvable:$true] %s234
          %240 = dma.hbm_to_vmem [thread:$0]  %s1, 1024, %s235, [#allocation7], 64, 64, 4
        $region16: #{tpu_custom_call.1} parent=11 // pred_fallthru
          _
        // Predicated region
        $region17: #{tpu_custom_call.1} parent=11 // pred_check
          %p241 = pneg %p101
        $region18: #{tpu_custom_call.1} parent=11 // pred_check_branch
          %243 = sbr.rel (%p241) target = $region20
        $region19: #{tpu_custom_call.1} parent=11 // pred_region
          _
        $region20: #{tpu_custom_call.1} parent=11 // pred_fallthru
          _
        // Predicated region
        $region21: #{tpu_custom_call.1} parent=11 // pred_check
          %p244 = pneg %p122
        $region22: #{tpu_custom_call.1} parent=11 // pred_check_branch
          %246 = sbr.rel (%p244) target = $region24
        $region23: #{tpu_custom_call.1} parent=11 // pred_region
          %s248 = ssub.s32 256, 256
          %249 = vsyncadd [#allocation7], %s248
          %s250 = sshll.u32 [#allocation8], 4
          %s251 = int_to_ptr.vmem [resolvable:$true] %s250
          %256 = dma.hbm_to_vmem [thread:$0]  %s3, 256, %s251, [#allocation7], 128, 128, 8
        $region24: #{tpu_custom_call.1} parent=11 // pred_fallthru
          _
        // Predicated region
        $region25: #{tpu_custom_call.1} parent=11 // pred_check
          %p257 = pneg %p143
        $region26: #{tpu_custom_call.1} parent=11 // pred_check_branch
          %259 = sbr.rel (%p257) target = $region28
        $region27: #{tpu_custom_call.1} parent=11 // pred_region
          _
        $region28: #{tpu_custom_call.1} parent=11 // pred_fallthru
          _
        // Predicated region
        $region29: #{tpu_custom_call.1} parent=11 // pred_check
          %p260 = pneg %p164
        $region30: #{tpu_custom_call.1} parent=11 // pred_check_branch
          %262 = sbr.rel (%p260) target = $region32
        $region31: #{tpu_custom_call.1} parent=11 // pred_region
          %s264 = ssub.s32 1024, 1024
          %265 = vsyncadd [#allocation10], %s264
          %s266 = sshll.u32 [#allocation9], 4
          %s267 = int_to_ptr.vmem [resolvable:$true] %s266
          %272 = dma.hbm_to_vmem [thread:$0]  %s5, 1024, %s267, [#allocation10], 64, 64, 4
        $region32: #{tpu_custom_call.1} parent=11 // pred_fallthru
          _
        // Predicated region
        $region33: #{tpu_custom_call.1} parent=11 // pred_check
          %p273 = pneg %p185
        $region34: #{tpu_custom_call.1} parent=11 // pred_check_branch
          %275 = sbr.rel (%p273) target = $region36
        $region35: #{tpu_custom_call.1} parent=11 // pred_region
          _
        $region36: #{tpu_custom_call.1} parent=11 // pred_fallthru
          _
      $region12: #{tpu_custom_call.1} parent=5 // pred_fallthru
        _
      %p276 = scmp.lt.s32.totalorder %s21, 4
      // Predicated region
      $region37: #{tpu_custom_call.1} parent=5 // pred_check
        %p277 = pneg %p276
      $region38: #{tpu_custom_call.1} parent=5 // pred_check_branch
        %279 = sbr.rel (%p277) target = $region40
      $region39: #{tpu_custom_call.1} parent=5 // pred_region
        // Predicated region
        $region41: #{tpu_custom_call.1} parent=39 // pred_check
          %p280 = pneg %p53
        $region42: #{tpu_custom_call.1} parent=39 // pred_check_branch
          %282 = sbr.rel (%p280) target = $region44
        $region43: #{tpu_custom_call.1} parent=39 // pred_region
          %s283 = sand.u32 %s43, 1
          %s284 = scalar_lea.sflag [#allocation4], %s283
          %s285 = sand.u32 %s43, 1
          %s286 = smul.addr %s285, 432
          %s287 = scalar_lea.vmem [#allocation3], %s286
          %s289 = ssub.s32 6912, 6912
          %290 = vsyncadd %s284, %s289
          %s291 = smul.addr %s28, 54
          %s292 = smul.addr %s291, 128
          %s293 = scalar_lea.hbm %s0, %s292
          %s294 = sshll.u32 %s287, 4
          %s295 = int_to_ptr.vmem [resolvable:$true] %s294
          %300 = dma.hbm_to_vmem [thread:$0]  %s293, 6912, %s295, %s284, 128, 128, 8
        $region44: #{tpu_custom_call.1} parent=39 // pred_fallthru
          _
      $region40: #{tpu_custom_call.1} parent=5 // pred_fallthru
        _
      %p301 = scmp.le.s32.totalorder 1, %s21
      %p302 = scmp.lt.s32.totalorder %s21, 5
      %p303 = pnand %p301, %p302
      %p304 = pneg %p303
      // Predicated region
      $region45: #{tpu_custom_call.1} parent=5 // pred_check
        _
      $region46: #{tpu_custom_call.1} parent=5 // pred_check_branch
        %306 = sbr.rel (%p303) target = $region48
      $region47: #{tpu_custom_call.1} parent=5 // pred_region
        %s307 = ssub.s32 %s21, 1
        %s308 = sand.u32 %s46, 1
        %s309 = scalar_lea.sflag [#allocation4], %s308
        %s310 = sand.u32 %s46, 1
        %s311 = smul.addr %s310, 432
        %s312 = scalar_lea.vmem [#allocation3], %s311
        // Predicated region
        $region49: #{tpu_custom_call.1} parent=47 // pred_check
          %p313 = pneg %p59
        $region50: #{tpu_custom_call.1} parent=47 // pred_check_branch
          %315 = sbr.rel (%p313) target = $region52
        $region51: #{tpu_custom_call.1} parent=47 // pred_region
          %316 = dma.done %s309, 6912
        $region52: #{tpu_custom_call.1} parent=47 // pred_fallthru
          _
        // Predicated region
        $region53: #{tpu_custom_call.1} parent=47 // pred_check
          %p317 = pneg %p80
        $region54: #{tpu_custom_call.1} parent=47 // pred_check_branch
          %319 = sbr.rel (%p317) target = $region56
        $region55: #{tpu_custom_call.1} parent=47 // pred_region
          %320 = dma.done [#allocation7], 1024
        $region56: #{tpu_custom_call.1} parent=47 // pred_fallthru
          _
        // Predicated region
        $region57: #{tpu_custom_call.1} parent=47 // pred_check
          %p321 = pneg %p122
        $region58: #{tpu_custom_call.1} parent=47 // pred_check_branch
          %323 = sbr.rel (%p321) target = $region60
        $region59: #{tpu_custom_call.1} parent=47 // pred_region
          %324 = dma.done [#allocation7], 256
        $region60: #{tpu_custom_call.1} parent=47 // pred_fallthru
          _
        // Predicated region
        $region61: #{tpu_custom_call.1} parent=47 // pred_check
          %p325 = pneg %p164
        $region62: #{tpu_custom_call.1} parent=47 // pred_check_branch
          %327 = sbr.rel (%p325) target = $region64
        $region63: #{tpu_custom_call.1} parent=47 // pred_region
          %328 = dma.done [#allocation10], 1024
        $region64: #{tpu_custom_call.1} parent=47 // pred_fallthru
          _
        %s329 = sand.u32 %s46, 1
        %s330 = scalar_lea.sflag [#allocation4], %s329
        %s331 = sand.u32 %s46, 1
        %s332 = smul.addr %s331, 432
        %s333 = scalar_lea.vmem [#allocation3], %s332
        %p334 = pneg %p59
        %p335 = pneg %p56
        %p336 = pneg %p80
        %p337 = pneg %p77
        %p338 = pneg %p101
        %p339 = pneg %p98
        %p340 = pneg %p122
        %p341 = pneg %p119
        %p342 = pneg %p143
        %p343 = pneg %p140
        %p344 = pneg %p164
        %p345 = pneg %p161
        %p346 = pneg %p185
        %p347 = pneg %p182
        %p348 = pneg %p213
        %p349 = pneg %p210
        %s350 = sand.u32 %s200, 1
        %s351 = scalar_lea.sflag [#allocation5], %s350
        %s352 = sand.u32 %s200, 1
        %s353 = smul.addr %s352, 128
        %s354 = scalar_lea.vmem [#allocation11], %s353
        %s355 = smul.u32 8, %s31
        %s357 = smul.u32 %s31, 8
        %s358 = smul.u32 %s357, 24
        %s359 = scalar_lea.vmem %s312, %s358 [#allocation3]
        %v360 = vld [vmem:[%s359] sm:$0xff]
        %v361 = vld [vmem:[%s359 + $0x8] sm:$0xff]
        %v362 = vld [vmem:[%s359 + $0x10] sm:$0xff]
        %v363 = vld [vmem:[%s359 + $0x18] sm:$0xff]
        %v364 = vld [vmem:[%s359 + $0x20] sm:$0xff]
        %v365 = vld [vmem:[%s359 + $0x28] sm:$0xff]
        %v366 = vld [vmem:[%s359 + $0x30] sm:$0xff]
        %v367 = vld [vmem:[%s359 + $0x38] sm:$0xff]
        %v368 = vld [vmem:[%s359 + $0x40] sm:$0xff]
        %v369 = vld [vmem:[%s359 + $0x48] sm:$0xff]
        %v370 = vld [vmem:[%s359 + $0x50] sm:$0xff]
        %v371 = vld [vmem:[%s359 + $0x58] sm:$0xff]
        %v372 = vld [vmem:[%s359 + $0x60] sm:$0xff]
        %v373 = vld [vmem:[%s359 + $0x68] sm:$0xff]
        %v374 = vld [vmem:[%s359 + $0x70] sm:$0xff]
        %v375 = vld [vmem:[%s359 + $0x78] sm:$0xff]
        %v376 = vld [vmem:[%s359 + $0x80] sm:$0xff]
        %v377 = vld [vmem:[%s359 + $0x88] sm:$0xff]
        %v378 = vld [vmem:[%s359 + $0x90] sm:$0xff]
        %v379 = vld [vmem:[%s359 + $0x98] sm:$0xff]
        %v380 = vld [vmem:[%s359 + $0xa0] sm:$0xff]
        %v381 = vld [vmem:[%s359 + $0xa8] sm:$0xff]
        %v382 = vld [vmem:[%s359 + $0xb0] sm:$0xff]
        %v383 = vld [vmem:[%s359 + $0xb8] sm:$0xff]
        %v384 = vld [vmem:[%s359 + $0xc0] sm:$0xff]
        %v385 = vld [vmem:[%s359 + $0xc8] sm:$0xff]
        %v386 = vld [vmem:[%s359 + $0xd0] sm:$0xff]
        %v387 = vld [vmem:[%s359 + $0xd8] sm:$0xff]
        %v388 = vld [vmem:[%s359 + $0xe0] sm:$0xff]
        %v389 = vld [vmem:[%s359 + $0xe8] sm:$0xff]
        %v390 = vpack.c.bf16 %v361, %v360
        %v391 = vpack.c.bf16 %v363, %v362
        %v392 = vpack.c.bf16 %v365, %v364
        %v393 = vpack.c.bf16 %v367, %v366
        %v394 = vpack.c.bf16 %v369, %v368
        %v395 = vpack.c.bf16 %v371, %v370
        %v396 = vpack.c.bf16 %v373, %v372
        %v397 = vpack.c.bf16 %v375, %v374
        %v398 = vpack.c.bf16 %v377, %v376
        %v399 = vpack.c.bf16 %v379, %v378
        %v400 = vpack.c.bf16 %v381, %v380
        %v401 = vpack.c.bf16 %v383, %v382
        %v402 = vpack.c.bf16 %v385, %v384
        %v403 = vpack.c.bf16 %v387, %v386
        %v404 = vpack.c.bf16 %v389, %v388
        %v405 = vld [vmem:[#allocation6] sm:$0xf]
        %v406 = vld [vmem:[#allocation6 + $0x4] sm:$0xf]
        %v407 = vld [vmem:[#allocation6 + $0x8] sm:$0xf]
        %v408 = vld [vmem:[#allocation6 + $0xc] sm:$0xf]
        %v409 = vld [vmem:[#allocation6 + $0x10] sm:$0xf]
        %v410 = vld [vmem:[#allocation6 + $0x14] sm:$0xf]
        %v411 = vld [vmem:[#allocation6 + $0x18] sm:$0xf]
        %v412 = vld [vmem:[#allocation6 + $0x1c] sm:$0xf]
        %v413 = vld [vmem:[#allocation6 + $0x20] sm:$0xf]
        %v414 = vld [vmem:[#allocation6 + $0x24] sm:$0xf]
        %v415 = vld [vmem:[#allocation6 + $0x28] sm:$0xf]
        %v416 = vld [vmem:[#allocation6 + $0x2c] sm:$0xf]
        %v417 = vld [vmem:[#allocation6 + $0x30] sm:$0xf]
        %v418 = vld [vmem:[#allocation6 + $0x34] sm:$0xf]
        %v419 = vld [vmem:[#allocation6 + $0x38] sm:$0xf]
        %v420 = vld [vmem:[#allocation6 + $0x3c] sm:$0xf]
        %v421 = vld [vmem:[%s2] sm:$0x1]
        %v423 = vlaneseq
        %v424 = vshrl.u32 %v423, 7
        %v425 = vsub.s32 0, %v424
        %v426 = vrot.slane %v421, %v425
        %v444 = vunpack.c.l.b16 %v405
        %v445 = vunpack.c.l.b16 %v406
        %v446 = vunpack.c.l.b16 %v407
        %v447 = vunpack.c.l.b16 %v408
        %v448 = vunpack.c.l.b16 %v409
        %v449 = vunpack.c.l.b16 %v410
        %v450 = vunpack.c.l.b16 %v411
        %v451 = vunpack.c.l.b16 %v412
        %v452 = vunpack.c.l.b16 %v413
        %v453 = vunpack.c.l.b16 %v414
        %v454 = vunpack.c.l.b16 %v415
        %v455 = vunpack.c.l.b16 %v416
        %v456 = vunpack.c.l.b16 %v417
        %v457 = vunpack.c.l.b16 %v418
        %v458 = vunpack.c.l.b16 %v419
        %v459 = vunpack.c.l.b16 %v420
        %v460 = vpack.c.b16 %v445, %v444
        %v461 = vpack.c.b16 %v447, %v446
        %v462 = vpack.c.b16 %v449, %v448
        %v463 = vpack.c.b16 %v451, %v450
        %v464 = vpack.c.b16 %v453, %v452
        %v465 = vpack.c.b16 %v455, %v454
        %v466 = vpack.c.b16 %v457, %v456
        %v467 = vpack.c.b16 %v459, %v458
        %476 = vmatprep.subr.bf16.mxu0 0
        %477 = vmatpush1.bf16.msra.mxu0 %v460
        %478 = vmatprep.subr.bf16.mxu0 0
        %479 = vmatpush1.bf16.msra.mxu0 %v461
        %480 = vmatprep.subr.bf16.mxu0 0
        %481 = vmatpush1.bf16.msra.mxu0 %v462
        %482 = vmatprep.subr.bf16.mxu0 0
        %483 = vmatpush1.bf16.msra.mxu0 %v463
        %484 = vmatprep.subr.bf16.mxu0 0
        %485 = vmatpush1.bf16.msra.mxu0 %v464
        %486 = vmatprep.subr.bf16.mxu0 0
        %487 = vmatpush1.bf16.msra.mxu0 %v465
        %488 = vmatprep.subr.bf16.mxu0 0
        %489 = vmatpush1.bf16.msra.mxu0 %v466
        %490 = vmatprep.subr.bf16.mxu0 0
        %491 = vmatpush1.bf16.msra.mxu0 %v467
        %492 = vmatprep.subr.bf16.mxu0 0
        %493 = vmatpush1.bf16.msra.mxu0 0
        %494 = vmatprep.subr.bf16.mxu0 0
        %495 = vmatpush1.bf16.msra.mxu0 0
        %496 = vmatprep.subr.bf16.mxu0 0
        %497 = vmatpush1.bf16.msra.mxu0 0
        %498 = vmatprep.subr.bf16.mxu0 0
        %499 = vmatpush1.bf16.msra.mxu0 0
        %500 = vmatprep.subr.bf16.mxu0 0
        %501 = vmatpush1.bf16.msra.mxu0 0
        %502 = vmatprep.subr.bf16.mxu0 0
        %503 = vmatpush1.bf16.msra.mxu0 0
        %504 = vmatprep.subr.bf16.mxu0 0
        %505 = vmatpush1.bf16.msra.mxu0 0
        %506 = vmatprep.subr.bf16.mxu0 0
        %507 = vmatpush1.bf16.msra.mxu0 0
        %508 = vmatprep.mubr.bf16.mxu0 0
        %509 = vmatmul.mubr.bf16.gmra.mrb[0].mxu0 %v390
        %v510 = vpop.f32.mrb[0].mxu0
        %v511 = vadd.f32 %v426, %v510
        %v512 = vpop.f32.mrb[0].mxu0
        %v513 = vpop.f32.mrb[0].mxu0
        %v514 = vadd.f32 %v426, %v513
        %v515 = vpop.f32.mrb[0].mxu0
        %516 = vmatprep.mubr.bf16.mxu0 0
        %517 = vmatmul.mubr.bf16.gmra.mrb[0].mxu0 %v391
        %v518 = vpop.f32.mrb[0].mxu0
        %v519 = vadd.f32 %v426, %v518
        %v520 = vpop.f32.mrb[0].mxu0
        %v521 = vpop.f32.mrb[0].mxu0
        %v522 = vadd.f32 %v426, %v521
        %v523 = vpop.f32.mrb[0].mxu0
        %524 = vmatprep.mubr.bf16.mxu0 0
        %525 = vmatmul.mubr.bf16.gmra.mrb[0].mxu0 %v392
        %v526 = vpop.f32.mrb[0].mxu0
        %v527 = vadd.f32 %v426, %v526
        %v528 = vpop.f32.mrb[0].mxu0
        %v529 = vpop.f32.mrb[0].mxu0
        %v530 = vadd.f32 %v426, %v529
        %v531 = vpop.f32.mrb[0].mxu0
        %532 = vmatprep.mubr.bf16.mxu0 0
        %533 = vmatmul.mubr.bf16.gmra.mrb[0].mxu0 %v393
        %v534 = vpop.f32.mrb[0].mxu0
        %v535 = vadd.f32 %v426, %v534
        %v536 = vpop.f32.mrb[0].mxu0
        %v537 = vpop.f32.mrb[0].mxu0
        %v538 = vadd.f32 %v426, %v537
        %v539 = vpop.f32.mrb[0].mxu0
        %540 = vmatprep.mubr.bf16.mxu0 0
        %541 = vmatmul.mubr.bf16.gmra.mrb[0].mxu0 %v394
        %v542 = vpop.f32.mrb[0].mxu0
        %v543 = vadd.f32 %v426, %v542
        %v544 = vpop.f32.mrb[0].mxu0
        %v545 = vpop.f32.mrb[0].mxu0
        %v546 = vadd.f32 %v426, %v545
        %v547 = vpop.f32.mrb[0].mxu0
        %548 = vmatprep.mubr.bf16.mxu0 0
        %549 = vmatmul.mubr.bf16.gmra.mrb[0].mxu0 %v395
        %v550 = vpop.f32.mrb[0].mxu0
        %v551 = vadd.f32 %v426, %v550
        %v552 = vpop.f32.mrb[0].mxu0
        %v553 = vpop.f32.mrb[0].mxu0
        %v554 = vadd.f32 %v426, %v553
        %v555 = vpop.f32.mrb[0].mxu0
        %556 = vmatprep.mubr.bf16.mxu0 0
        %557 = vmatmul.mubr.bf16.gmra.mrb[0].mxu0 %v396
        %v558 = vpop.f32.mrb[0].mxu0
        %v559 = vadd.f32 %v426, %v558
        %v560 = vpop.f32.mrb[0].mxu0
        %v561 = vpop.f32.mrb[0].mxu0
        %v562 = vadd.f32 %v426, %v561
        %v563 = vpop.f32.mrb[0].mxu0
        %564 = vmatprep.mubr.bf16.mxu0 0
        %565 = vmatmul.mubr.bf16.gmra.mrb[0].mxu0 %v397
        %v566 = vpop.f32.mrb[0].mxu0
        %v567 = vadd.f32 %v426, %v566
        %v568 = vpop.f32.mrb[0].mxu0
        %v569 = vpop.f32.mrb[0].mxu0
        %v570 = vadd.f32 %v426, %v569
        %v571 = vpop.f32.mrb[0].mxu0
        %572 = vmatprep.mubr.bf16.mxu0 0
        %573 = vmatmul.mubr.bf16.gmra.mrb[0].mxu0 %v398
        %v574 = vpop.f32.mrb[0].mxu0
        %v575 = vadd.f32 %v426, %v574
        %v576 = vpop.f32.mrb[0].mxu0
        %v577 = vpop.f32.mrb[0].mxu0
        %v578 = vadd.f32 %v426, %v577
        %v579 = vpop.f32.mrb[0].mxu0
        %580 = vmatprep.mubr.bf16.mxu0 0
        %581 = vmatmul.mubr.bf16.gmra.mrb[0].mxu0 %v399
        %v582 = vpop.f32.mrb[0].mxu0
        %v583 = vadd.f32 %v426, %v582
        %v584 = vpop.f32.mrb[0].mxu0
        %v585 = vpop.f32.mrb[0].mxu0
        %v586 = vadd.f32 %v426, %v585
        %v587 = vpop.f32.mrb[0].mxu0
        %588 = vmatprep.mubr.bf16.mxu0 0
        %589 = vmatmul.mubr.bf16.gmra.mrb[0].mxu0 %v400
        %v590 = vpop.f32.mrb[0].mxu0
        %v591 = vadd.f32 %v426, %v590
        %v592 = vpop.f32.mrb[0].mxu0
        %v593 = vpop.f32.mrb[0].mxu0
        %v594 = vadd.f32 %v426, %v593
        %v595 = vpop.f32.mrb[0].mxu0
        %596 = vmatprep.mubr.bf16.mxu0 0
        %597 = vmatmul.mubr.bf16.gmra.mrb[0].mxu0 %v401
        %v598 = vpop.f32.mrb[0].mxu0
        %v599 = vadd.f32 %v426, %v598
        %v600 = vpop.f32.mrb[0].mxu0
        %v601 = vpop.f32.mrb[0].mxu0
        %v602 = vadd.f32 %v426, %v601
        %v603 = vpop.f32.mrb[0].mxu0
        %604 = vmatprep.mubr.bf16.mxu0 0
        %605 = vmatmul.mubr.bf16.gmra.mrb[0].mxu0 %v402
        %v606 = vpop.f32.mrb[0].mxu0
        %v607 = vadd.f32 %v426, %v606
        %v608 = vpop.f32.mrb[0].mxu0
        %v609 = vpop.f32.mrb[0].mxu0
        %v610 = vadd.f32 %v426, %v609
        %v611 = vpop.f32.mrb[0].mxu0
        %612 = vmatprep.mubr.bf16.mxu0 0
        %613 = vmatmul.mubr.bf16.gmra.mrb[0].mxu0 %v403
        %v614 = vpop.f32.mrb[0].mxu0
        %v615 = vadd.f32 %v426, %v614
        %v616 = vpop.f32.mrb[0].mxu0
        %v617 = vpop.f32.mrb[0].mxu0
        %v618 = vadd.f32 %v426, %v617
        %v619 = vpop.f32.mrb[0].mxu0
        %620 = vmatprep.mubr.bf16.mxu0 0
        %621 = vmatmul.mubr.bf16.gmra.mrb[0].mxu0 %v404
        %v622 = vpop.f32.mrb[0].mxu0
        %v623 = vadd.f32 %v426, %v622
        %v624 = vpop.f32.mrb[0].mxu0
        %v625 = vpop.f32.mrb[0].mxu0
        %v626 = vadd.f32 %v426, %v625
        %v627 = vpop.f32.mrb[0].mxu0
        %628 = vdwg.mxu0
        %v629 = vmax.f32 %v511, 0.0
        %v630 = vmax.f32 %v514, 0.0
        %v631 = vmax.f32 %v519, 0.0
        %v632 = vmax.f32 %v522, 0.0
        %v633 = vmax.f32 %v527, 0.0
        %v634 = vmax.f32 %v530, 0.0
        %v635 = vmax.f32 %v535, 0.0
        %v636 = vmax.f32 %v538, 0.0
        %v637 = vmax.f32 %v543, 0.0
        %v638 = vmax.f32 %v546, 0.0
        %v639 = vmax.f32 %v551, 0.0
        %v640 = vmax.f32 %v554, 0.0
        %v641 = vmax.f32 %v559, 0.0
        %v642 = vmax.f32 %v562, 0.0
        %v643 = vmax.f32 %v567, 0.0
        %v644 = vmax.f32 %v570, 0.0
        %v645 = vmax.f32 %v575, 0.0
        %v646 = vmax.f32 %v578, 0.0
        %v647 = vmax.f32 %v583, 0.0
        %v648 = vmax.f32 %v586, 0.0
        %v649 = vmax.f32 %v591, 0.0
        %v650 = vmax.f32 %v594, 0.0
        %v651 = vmax.f32 %v599, 0.0
        %v652 = vmax.f32 %v602, 0.0
        %v653 = vmax.f32 %v607, 0.0
        %v654 = vmax.f32 %v610, 0.0
        %v655 = vmax.f32 %v615, 0.0
        %v656 = vmax.f32 %v618, 0.0
        %v657 = vmax.f32 %v623, 0.0
        %v658 = vmax.f32 %v626, 0.0
        %v659 = vmin.f32 %v629, 6.0
        %v660 = vmin.f32 %v630, 6.0
        %v661 = vmin.f32 %v631, 6.0
        %v662 = vmin.f32 %v632, 6.0
        %v663 = vmin.f32 %v633, 6.0
        %v664 = vmin.f32 %v634, 6.0
        %v665 = vmin.f32 %v635, 6.0
        %v666 = vmin.f32 %v636, 6.0
        %v667 = vmin.f32 %v637, 6.0
        %v668 = vmin.f32 %v638, 6.0
        %v669 = vmin.f32 %v639, 6.0
        %v670 = vmin.f32 %v640, 6.0
        %v671 = vmin.f32 %v641, 6.0
        %v672 = vmin.f32 %v642, 6.0
        %v673 = vmin.f32 %v643, 6.0
        %v674 = vmin.f32 %v644, 6.0
        %v675 = vmin.f32 %v645, 6.0
        %v676 = vmin.f32 %v646, 6.0
        %v677 = vmin.f32 %v647, 6.0
        %v678 = vmin.f32 %v648, 6.0
        %v679 = vmin.f32 %v649, 6.0
        %v680 = vmin.f32 %v650, 6.0
        %v681 = vmin.f32 %v651, 6.0
        %v682 = vmin.f32 %v652, 6.0
        %v683 = vmin.f32 %v653, 6.0
        %v684 = vmin.f32 %v654, 6.0
        %v685 = vmin.f32 %v655, 6.0
        %v686 = vmin.f32 %v656, 6.0
        %v687 = vmin.f32 %v657, 6.0
        %v688 = vmin.f32 %v658, 6.0
        %689 = vst [vmem:[#allocation2] sm:$0xff] %v659
        %690 = vst [vmem:[#allocation2 + $0x8] sm:$0xff] %v660
        %691 = vst [vmem:[#allocation2 + $0x10] sm:$0xff] %v661
        %692 = vst [vmem:[#allocation2 + $0x18] sm:$0xff] %v662
        %693 = vst [vmem:[#allocation2 + $0x20] sm:$0xff] %v663
        %694 = vst [vmem:[#allocation2 + $0x28] sm:$0xff] %v664
        %695 = vst [vmem:[#allocation2 + $0x30] sm:$0xff] %v665
        %696 = vst [vmem:[#allocation2 + $0x38] sm:$0xff] %v666
        %697 = vst [vmem:[#allocation2 + $0x40] sm:$0xff] %v667
        %698 = vst [vmem:[#allocation2 + $0x48] sm:$0xff] %v668
        %699 = vst [vmem:[#allocation2 + $0x50] sm:$0xff] %v669
        %700 = vst [vmem:[#allocation2 + $0x58] sm:$0xff] %v670
        %701 = vst [vmem:[#allocation2 + $0x60] sm:$0xff] %v671
        %702 = vst [vmem:[#allocation2 + $0x68] sm:$0xff] %v672
        %703 = vst [vmem:[#allocation2 + $0x70] sm:$0xff] %v673
        %704 = vst [vmem:[#allocation2 + $0x78] sm:$0xff] %v674
        %705 = vst [vmem:[#allocation2 + $0x80] sm:$0xff] %v675
        %706 = vst [vmem:[#allocation2 + $0x88] sm:$0xff] %v676
        %707 = vst [vmem:[#allocation2 + $0x90] sm:$0xff] %v677
        %708 = vst [vmem:[#allocation2 + $0x98] sm:$0xff] %v678
        %709 = vst [vmem:[#allocation2 + $0xa0] sm:$0xff] %v679
        %710 = vst [vmem:[#allocation2 + $0xa8] sm:$0xff] %v680
        %711 = vst [vmem:[#allocation2 + $0xb0] sm:$0xff] %v681
        %712 = vst [vmem:[#allocation2 + $0xb8] sm:$0xff] %v682
        %713 = vst [vmem:[#allocation2 + $0xc0] sm:$0xff] %v683
        %714 = vst [vmem:[#allocation2 + $0xc8] sm:$0xff] %v684
        %715 = vst [vmem:[#allocation2 + $0xd0] sm:$0xff] %v685
        %716 = vst [vmem:[#allocation2 + $0xd8] sm:$0xff] %v686
        %717 = vst [vmem:[#allocation2 + $0xe0] sm:$0xff] %v687
        %718 = vst [vmem:[#allocation2 + $0xe8] sm:$0xff] %v688
        %719 = vst [vmem:[#allocation2] sm:$0x1] 0.0
        %720 = vst [vmem:[#allocation2 + $0x18] sm:$0x1] 0.0
        %721 = vst [vmem:[#allocation2 + $0x30] sm:$0x1] 0.0
        %722 = vst [vmem:[#allocation2 + $0x48] sm:$0x1] 0.0
        %723 = vst [vmem:[#allocation2 + $0x60] sm:$0x1] 0.0
        %724 = vst [vmem:[#allocation2 + $0x78] sm:$0x1] 0.0
        %725 = vst [vmem:[#allocation2 + $0x90] sm:$0x1] 0.0
        %726 = vst [vmem:[#allocation2 + $0xa8] sm:$0x1] 0.0
        %727 = vst [vmem:[#allocation2 + $0xc0] sm:$0x1] 0.0
        %728 = vst [vmem:[#allocation2 + $0xd8] sm:$0x1] 0.0
        %729 = vst [vmem:[#allocation2 + $0x11] sm:$0x1] 0.0
        %730 = vst [vmem:[#allocation2 + $0x29] sm:$0x1] 0.0
        %731 = vst [vmem:[#allocation2 + $0x41] sm:$0x1] 0.0
        %732 = vst [vmem:[#allocation2 + $0x59] sm:$0x1] 0.0
        %733 = vst [vmem:[#allocation2 + $0x71] sm:$0x1] 0.0
        %734 = vst [vmem:[#allocation2 + $0x89] sm:$0x1] 0.0
        %735 = vst [vmem:[#allocation2 + $0xa1] sm:$0x1] 0.0
        %736 = vst [vmem:[#allocation2 + $0xb9] sm:$0x1] 0.0
        %737 = vst [vmem:[#allocation2 + $0xd1] sm:$0x1] 0.0
        %738 = vst [vmem:[#allocation2 + $0xe9] sm:$0x1] 0.0
        %p739 = scmp.eq.s32.totalorder %s31, 0
        // Predicated region
        $region65: #{tpu_custom_call.1} parent=47 // pred_check
          %p740 = pneg %p739
        $region66: #{tpu_custom_call.1} parent=47 // pred_check_branch
          %742 = sbr.rel (%p740) target = $region68
        $region67: #{tpu_custom_call.1} parent=47 // pred_region
          %743 = vst [vmem:[#allocation2] sm:$0xff] 0.0
          %744 = vst [vmem:[#allocation2 + $0x8] sm:$0xff] 0.0
          %745 = vst [vmem:[#allocation2 + $0x10] sm:$0xff] 0.0
        $region68: #{tpu_custom_call.1} parent=47 // pred_fallthru
          _
        %p746 = scmp.eq.s32.totalorder %s31, 1
        // Predicated region
        $region69: #{tpu_custom_call.1} parent=47 // pred_check
          %p747 = pneg %p746
        $region70: #{tpu_custom_call.1} parent=47 // pred_check_branch
          %749 = sbr.rel (%p747) target = $region72
        $region71: #{tpu_custom_call.1} parent=47 // pred_region
          %s750 = scalar_lea.vmem [#allocation2], 216
          %751 = vst [vmem:[%s750] sm:$0xff] 0.0
          %752 = vst [vmem:[%s750 + $0x8] sm:$0xff] 0.0
          %753 = vst [vmem:[%s750 + $0x10] sm:$0xff] 0.0
        $region72: #{tpu_custom_call.1} parent=47 // pred_fallthru
          _
        %v754 = vld [vmem:[#allocation8] sm:$0xff]
        %v755 = vld [vmem:[#allocation8 + $0x8] sm:$0x1]
        %v756 = vld [vmem:[#allocation2] sm:$0xff]
        %v757 = vld [vmem:[#allocation2 + $0x8] sm:$0xff]
        %v758 = vld [vmem:[#allocation2 + $0x10] sm:$0xff]
        %v759 = vld [vmem:[#allocation2 + $0x18] sm:$0xff]
        %v760 = vld [vmem:[#allocation2 + $0x20] sm:$0xff]
        %v761 = vld [vmem:[#allocation2 + $0x28] sm:$0xff]
        %v762 = vld [vmem:[#allocation2 + $0x30] sm:$0xff]
        %v763 = vld [vmem:[#allocation2 + $0x38] sm:$0xff]
        %v764 = vld [vmem:[#allocation2 + $0x40] sm:$0xff]
        %v765 = vld [vmem:[#allocation2 + $0x48] sm:$0xff]
        %v766 = vld [vmem:[#allocation2 + $0x50] sm:$0xff]
        %v767 = vld [vmem:[#allocation2 + $0x58] sm:$0xff]
        %v768 = vld [vmem:[#allocation2 + $0x60] sm:$0xff]
        %v769 = vld [vmem:[#allocation2 + $0x68] sm:$0xff]
        %v770 = vld [vmem:[#allocation2 + $0x70] sm:$0xff]
        %v771 = vld [vmem:[#allocation2 + $0x78] sm:$0xff]
        %v772 = vld [vmem:[#allocation2 + $0x80] sm:$0xff]
        %v773 = vld [vmem:[#allocation2 + $0x88] sm:$0xff]
        %v774 = vld [vmem:[#allocation2 + $0x90] sm:$0xff]
        %v775 = vld [vmem:[#allocation2 + $0x98] sm:$0xff]
        %v776 = vld [vmem:[#allocation2 + $0xa0] sm:$0xff]
        %v777 = vld [vmem:[#allocation2 + $0xa8] sm:$0xff]
        %v778 = vld [vmem:[#allocation2 + $0xb0] sm:$0xff]
        %v779 = vld [vmem:[#allocation2 + $0xb8] sm:$0xff]
        %v780 = vlaneseq
        %v781 = vshrl.u32 %v780, 7
        %v782 = vsub.s32 0, %v781
        %v783 = vrot.slane %v754, %v782
        %v784 = vmul.f32 %v756, %v783
        %v785 = vmul.f32 %v757, %v783
        %v786 = vmul.f32 %v759, %v783
        %v787 = vmul.f32 %v760, %v783
        %v788 = vmul.f32 %v762, %v783
        %v789 = vmul.f32 %v763, %v783
        %v790 = vmul.f32 %v765, %v783
        %v791 = vmul.f32 %v766, %v783
        %v792 = vmul.f32 %v768, %v783
        %v793 = vmul.f32 %v769, %v783
        %v794 = vmul.f32 %v771, %v783
        %v795 = vmul.f32 %v772, %v783
        %v796 = vmul.f32 %v774, %v783
        %v797 = vmul.f32 %v775, %v783
        %v798 = vmul.f32 %v777, %v783
        %v799 = vmul.f32 %v778, %v783
        %v800 = vlaneseq
        %v801 = vshrl.u32 %v800, 7
        %v802 = vsub.s32 1, %v801
        %v803 = vrot.slane %v754, %v802
        %v804 = vmul.f32 %v756, %v803
        %v805 = vmul.f32 %v757, %v803
        %v806 = vmul.f32 %v758, %v803
        %v807 = vmul.f32 %v759, %v803
        %v808 = vmul.f32 %v760, %v803
        %v809 = vmul.f32 %v761, %v803
        %v810 = vmul.f32 %v762, %v803
        %v811 = vmul.f32 %v763, %v803
        %v812 = vmul.f32 %v764, %v803
        %v813 = vmul.f32 %v765, %v803
        %v814 = vmul.f32 %v766, %v803
        %v815 = vmul.f32 %v767, %v803
        %v816 = vmul.f32 %v768, %v803
        %v817 = vmul.f32 %v769, %v803
        %v818 = vmul.f32 %v770, %v803
        %v819 = vmul.f32 %v771, %v803
        %v820 = vmul.f32 %v772, %v803
        %v821 = vmul.f32 %v773, %v803
        %v822 = vmul.f32 %v774, %v803
        %v823 = vmul.f32 %v775, %v803
        %v824 = vmul.f32 %v776, %v803
        %v825 = vmul.f32 %v777, %v803
        %v826 = vmul.f32 %v778, %v803
        %v827 = vmul.f32 %v779, %v803
        %vm852 = vcmask 1046528
        %v853 = vrot.slane %v804, 1
        %v854 = vrot.slane %v805, 1
        %v855 = vsel %vm852, %v853, %v854
        %v856 = vrot.slane %v806, 1
        %v857 = vsel %vm852, %v854, %v856
        %v858 = vrot.slane %v807, 1
        %v859 = vrot.slane %v808, 1
        %v860 = vsel %vm852, %v858, %v859
        %v861 = vrot.slane %v809, 1
        %v862 = vsel %vm852, %v859, %v861
        %v863 = vrot.slane %v810, 1
        %v864 = vrot.slane %v811, 1
        %v865 = vsel %vm852, %v863, %v864
        %v866 = vrot.slane %v812, 1
        %v867 = vsel %vm852, %v864, %v866
        %v868 = vrot.slane %v813, 1
        %v869 = vrot.slane %v814, 1
        %v870 = vsel %vm852, %v868, %v869
        %v871 = vrot.slane %v815, 1
        %v872 = vsel %vm852, %v869, %v871
        %v873 = vrot.slane %v816, 1
        %v874 = vrot.slane %v817, 1
        %v875 = vsel %vm852, %v873, %v874
        %v876 = vrot.slane %v818, 1
        %v877 = vsel %vm852, %v874, %v876
        %v878 = vrot.slane %v819, 1
        %v879 = vrot.slane %v820, 1
        %v880 = vsel %vm852, %v878, %v879
        %v881 = vrot.slane %v821, 1
        %v882 = vsel %vm852, %v879, %v881
        %v883 = vrot.slane %v822, 1
        %v884 = vrot.slane %v823, 1
        %v885 = vsel %vm852, %v883, %v884
        %v886 = vrot.slane %v824, 1
        %v887 = vsel %vm852, %v884, %v886
        %v888 = vrot.slane %v825, 1
        %v889 = vrot.slane %v826, 1
        %v890 = vsel %vm852, %v888, %v889
        %v891 = vrot.slane %v827, 1
        %v892 = vsel %vm852, %v889, %v891
        %v909 = vadd.f32 %v784, %v855
        %v910 = vadd.f32 %v785, %v857
        %v911 = vadd.f32 %v786, %v860
        %v912 = vadd.f32 %v787, %v862
        %v913 = vadd.f32 %v788, %v865
        %v914 = vadd.f32 %v789, %v867
        %v915 = vadd.f32 %v790, %v870
        %v916 = vadd.f32 %v791, %v872
        %v917 = vadd.f32 %v792, %v875
        %v918 = vadd.f32 %v793, %v877
        %v919 = vadd.f32 %v794, %v880
        %v920 = vadd.f32 %v795, %v882
        %v921 = vadd.f32 %v796, %v885
        %v922 = vadd.f32 %v797, %v887
        %v923 = vadd.f32 %v798, %v890
        %v924 = vadd.f32 %v799, %v892
        %v925 = vlaneseq
        %v926 = vshrl.u32 %v925, 7
        %v927 = vsub.s32 2, %v926
        %v928 = vrot.slane %v754, %v927
        %v929 = vmul.f32 %v756, %v928
        %v930 = vmul.f32 %v757, %v928
        %v931 = vmul.f32 %v758, %v928
        %v932 = vmul.f32 %v759, %v928
        %v933 = vmul.f32 %v760, %v928
        %v934 = vmul.f32 %v761, %v928
        %v935 = vmul.f32 %v762, %v928
        %v936 = vmul.f32 %v763, %v928
        %v937 = vmul.f32 %v764, %v928
        %v938 = vmul.f32 %v765, %v928
        %v939 = vmul.f32 %v766, %v928
        %v940 = vmul.f32 %v767, %v928
        %v941 = vmul.f32 %v768, %v928
        %v942 = vmul.f32 %v769, %v928
        %v943 = vmul.f32 %v770, %v928
        %v944 = vmul.f32 %v771, %v928
        %v945 = vmul.f32 %v772, %v928
        %v946 = vmul.f32 %v773, %v928
        %v947 = vmul.f32 %v774, %v928
        %v948 = vmul.f32 %v775, %v928
        %v949 = vmul.f32 %v776, %v928
        %v950 = vmul.f32 %v777, %v928
        %v951 = vmul.f32 %v778, %v928
        %v952 = vmul.f32 %v779, %v928
        %vm977 = vcmask 1045504
        %v978 = vrot.slane %v929, 2
        %v979 = vrot.slane %v930, 2
        %v980 = vsel %vm977, %v978, %v979
        %v981 = vrot.slane %v931, 2
        %v982 = vsel %vm977, %v979, %v981
        %v983 = vrot.slane %v932, 2
        %v984 = vrot.slane %v933, 2
        %v985 = vsel %vm977, %v983, %v984
        %v986 = vrot.slane %v934, 2
        %v987 = vsel %vm977, %v984, %v986
        %v988 = vrot.slane %v935, 2
        %v989 = vrot.slane %v936, 2
        %v990 = vsel %vm977, %v988, %v989
        %v991 = vrot.slane %v937, 2
        %v992 = vsel %vm977, %v989, %v991
        %v993 = vrot.slane %v938, 2
        %v994 = vrot.slane %v939, 2
        %v995 = vsel %vm977, %v993, %v994
        %v996 = vrot.slane %v940, 2
        %v997 = vsel %vm977, %v994, %v996
        %v998 = vrot.slane %v941, 2
        %v999 = vrot.slane %v942, 2
        %v1000 = vsel %vm977, %v998, %v999
        %v1001 = vrot.slane %v943, 2
        %v1002 = vsel %vm977, %v999, %v1001
        %v1003 = vrot.slane %v944, 2
        %v1004 = vrot.slane %v945, 2
        %v1005 = vsel %vm977, %v1003, %v1004
        %v1006 = vrot.slane %v946, 2
        %v1007 = vsel %vm977, %v1004, %v1006
        %v1008 = vrot.slane %v947, 2
        %v1009 = vrot.slane %v948, 2
        %v1010 = vsel %vm977, %v1008, %v1009
        %v1011 = vrot.slane %v949, 2
        %v1012 = vsel %vm977, %v1009, %v1011
        %v1013 = vrot.slane %v950, 2
        %v1014 = vrot.slane %v951, 2
        %v1015 = vsel %vm977, %v1013, %v1014
        %v1016 = vrot.slane %v952, 2
        %v1017 = vsel %vm977, %v1014, %v1016
        %v1034 = vadd.f32 %v909, %v980
        %v1035 = vadd.f32 %v910, %v982
        %v1036 = vadd.f32 %v911, %v985
        %v1037 = vadd.f32 %v912, %v987
        %v1038 = vadd.f32 %v913, %v990
        %v1039 = vadd.f32 %v914, %v992
        %v1040 = vadd.f32 %v915, %v995
        %v1041 = vadd.f32 %v916, %v997
        %v1042 = vadd.f32 %v917, %v1000
        %v1043 = vadd.f32 %v918, %v1002
        %v1044 = vadd.f32 %v919, %v1005
        %v1045 = vadd.f32 %v920, %v1007
        %v1046 = vadd.f32 %v921, %v1010
        %v1047 = vadd.f32 %v922, %v1012
        %v1048 = vadd.f32 %v923, %v1015
        %v1049 = vadd.f32 %v924, %v1017
        %s1050 = scalar_lea.vmem [#allocation2], 24
        %v1051 = vld [vmem:[%s1050] sm:$0xff]
        %v1052 = vld [vmem:[%s1050 + $0x8] sm:$0xff]
        %v1053 = vld [vmem:[%s1050 + $0x10] sm:$0xff]
        %v1054 = vld [vmem:[%s1050 + $0x18] sm:$0xff]
        %v1055 = vld [vmem:[%s1050 + $0x20] sm:$0xff]
        %v1056 = vld [vmem:[%s1050 + $0x28] sm:$0xff]
        %v1057 = vld [vmem:[%s1050 + $0x30] sm:$0xff]
        %v1058 = vld [vmem:[%s1050 + $0x38] sm:$0xff]
        %v1059 = vld [vmem:[%s1050 + $0x40] sm:$0xff]
        %v1060 = vld [vmem:[%s1050 + $0x48] sm:$0xff]
        %v1061 = vld [vmem:[%s1050 + $0x50] sm:$0xff]
        %v1062 = vld [vmem:[%s1050 + $0x58] sm:$0xff]
        %v1063 = vld [vmem:[%s1050 + $0x60] sm:$0xff]
        %v1064 = vld [vmem:[%s1050 + $0x68] sm:$0xff]
        %v1065 = vld [vmem:[%s1050 + $0x70] sm:$0xff]
        %v1066 = vld [vmem:[%s1050 + $0x78] sm:$0xff]
        %v1067 = vld [vmem:[%s1050 + $0x80] sm:$0xff]
        %v1068 = vld [vmem:[%s1050 + $0x88] sm:$0xff]
        %v1069 = vld [vmem:[%s1050 + $0x90] sm:$0xff]
        %v1070 = vld [vmem:[%s1050 + $0x98] sm:$0xff]
        %v1071 = vld [vmem:[%s1050 + $0xa0] sm:$0xff]
        %v1072 = vld [vmem:[%s1050 + $0xa8] sm:$0xff]
        %v1073 = vld [vmem:[%s1050 + $0xb0] sm:$0xff]
        %v1074 = vld [vmem:[%s1050 + $0xb8] sm:$0xff]
        %v1075 = vlaneseq
        %v1076 = vshrl.u32 %v1075, 7
        %v1077 = vsub.s32 3, %v1076
        %v1078 = vrot.slane %v754, %v1077
        %v1079 = vmul.f32 %v1051, %v1078
        %v1080 = vmul.f32 %v1052, %v1078
        %v1081 = vmul.f32 %v1054, %v1078
        %v1082 = vmul.f32 %v1055, %v1078
        %v1083 = vmul.f32 %v1057, %v1078
        %v1084 = vmul.f32 %v1058, %v1078
        %v1085 = vmul.f32 %v1060, %v1078
        %v1086 = vmul.f32 %v1061, %v1078
        %v1087 = vmul.f32 %v1063, %v1078
        %v1088 = vmul.f32 %v1064, %v1078
        %v1089 = vmul.f32 %v1066, %v1078
        %v1090 = vmul.f32 %v1067, %v1078
        %v1091 = vmul.f32 %v1069, %v1078
        %v1092 = vmul.f32 %v1070, %v1078
        %v1093 = vmul.f32 %v1072, %v1078
        %v1094 = vmul.f32 %v1073, %v1078
        %v1095 = vadd.f32 %v1034, %v1079
        %v1096 = vadd.f32 %v1035, %v1080
        %v1097 = vadd.f32 %v1036, %v1081
        %v1098 = vadd.f32 %v1037, %v1082
        %v1099 = vadd.f32 %v1038, %v1083
        %v1100 = vadd.f32 %v1039, %v1084
        %v1101 = vadd.f32 %v1040, %v1085
        %v1102 = vadd.f32 %v1041, %v1086
        %v1103 = vadd.f32 %v1042, %v1087
        %v1104 = vadd.f32 %v1043, %v1088
        %v1105 = vadd.f32 %v1044, %v1089
        %v1106 = vadd.f32 %v1045, %v1090
        %v1107 = vadd.f32 %v1046, %v1091
        %v1108 = vadd.f32 %v1047, %v1092
        %v1109 = vadd.f32 %v1048, %v1093
        %v1110 = vadd.f32 %v1049, %v1094
        %v1111 = vlaneseq
        %v1112 = vshrl.u32 %v1111, 7
        %v1113 = vsub.s32 4, %v1112
        %v1114 = vrot.slane %v754, %v1113
        %v1115 = vmul.f32 %v1051, %v1114
        %v1116 = vmul.f32 %v1052, %v1114
        %v1117 = vmul.f32 %v1053, %v1114
        %v1118 = vmul.f32 %v1054, %v1114
        %v1119 = vmul.f32 %v1055, %v1114
        %v1120 = vmul.f32 %v1056, %v1114
        %v1121 = vmul.f32 %v1057, %v1114
        %v1122 = vmul.f32 %v1058, %v1114
        %v1123 = vmul.f32 %v1059, %v1114
        %v1124 = vmul.f32 %v1060, %v1114
        %v1125 = vmul.f32 %v1061, %v1114
        %v1126 = vmul.f32 %v1062, %v1114
        %v1127 = vmul.f32 %v1063, %v1114
        %v1128 = vmul.f32 %v1064, %v1114
        %v1129 = vmul.f32 %v1065, %v1114
        %v1130 = vmul.f32 %v1066, %v1114
        %v1131 = vmul.f32 %v1067, %v1114
        %v1132 = vmul.f32 %v1068, %v1114
        %v1133 = vmul.f32 %v1069, %v1114
        %v1134 = vmul.f32 %v1070, %v1114
        %v1135 = vmul.f32 %v1071, %v1114
        %v1136 = vmul.f32 %v1072, %v1114
        %v1137 = vmul.f32 %v1073, %v1114
        %v1138 = vmul.f32 %v1074, %v1114
        %v1163 = vrot.slane %v1115, 1
        %v1164 = vrot.slane %v1116, 1
        %v1165 = vsel %vm852, %v1163, %v1164
        %v1166 = vrot.slane %v1117, 1
        %v1167 = vsel %vm852, %v1164, %v1166
        %v1168 = vrot.slane %v1118, 1
        %v1169 = vrot.slane %v1119, 1
        %v1170 = vsel %vm852, %v1168, %v1169
        %v1171 = vrot.slane %v1120, 1
        %v1172 = vsel %vm852, %v1169, %v1171
        %v1173 = vrot.slane %v1121, 1
        %v1174 = vrot.slane %v1122, 1
        %v1175 = vsel %vm852, %v1173, %v1174
        %v1176 = vrot.slane %v1123, 1
        %v1177 = vsel %vm852, %v1174, %v1176
        %v1178 = vrot.slane %v1124, 1
        %v1179 = vrot.slane %v1125, 1
        %v1180 = vsel %vm852, %v1178, %v1179
        %v1181 = vrot.slane %v1126, 1
        %v1182 = vsel %vm852, %v1179, %v1181
        %v1183 = vrot.slane %v1127, 1
        %v1184 = vrot.slane %v1128, 1
        %v1185 = vsel %vm852, %v1183, %v1184
        %v1186 = vrot.slane %v1129, 1
        %v1187 = vsel %vm852, %v1184, %v1186
        %v1188 = vrot.slane %v1130, 1
        %v1189 = vrot.slane %v1131, 1
        %v1190 = vsel %vm852, %v1188, %v1189
        %v1191 = vrot.slane %v1132, 1
        %v1192 = vsel %vm852, %v1189, %v1191
        %v1193 = vrot.slane %v1133, 1
        %v1194 = vrot.slane %v1134, 1
        %v1195 = vsel %vm852, %v1193, %v1194
        %v1196 = vrot.slane %v1135, 1
        %v1197 = vsel %vm852, %v1194, %v1196
        %v1198 = vrot.slane %v1136, 1
        %v1199 = vrot.slane %v1137, 1
        %v1200 = vsel %vm852, %v1198, %v1199
        %v1201 = vrot.slane %v1138, 1
        %v1202 = vsel %vm852, %v1199, %v1201
        %v1219 = vadd.f32 %v1095, %v1165
        %v1220 = vadd.f32 %v1096, %v1167
        %v1221 = vadd.f32 %v1097, %v1170
        %v1222 = vadd.f32 %v1098, %v1172
        %v1223 = vadd.f32 %v1099, %v1175
        %v1224 = vadd.f32 %v1100, %v1177
        %v1225 = vadd.f32 %v1101, %v1180
        %v1226 = vadd.f32 %v1102, %v1182
        %v1227 = vadd.f32 %v1103, %v1185
        %v1228 = vadd.f32 %v1104, %v1187
        %v1229 = vadd.f32 %v1105, %v1190
        %v1230 = vadd.f32 %v1106, %v1192
        %v1231 = vadd.f32 %v1107, %v1195
        %v1232 = vadd.f32 %v1108, %v1197
        %v1233 = vadd.f32 %v1109, %v1200
        %v1234 = vadd.f32 %v1110, %v1202
        %v1235 = vlaneseq
        %v1236 = vshrl.u32 %v1235, 7
        %v1237 = vsub.s32 5, %v1236
        %v1238 = vrot.slane %v754, %v1237
        %v1239 = vmul.f32 %v1051, %v1238
        %v1240 = vmul.f32 %v1052, %v1238
        %v1241 = vmul.f32 %v1053, %v1238
        %v1242 = vmul.f32 %v1054, %v1238
        %v1243 = vmul.f32 %v1055, %v1238
        %v1244 = vmul.f32 %v1056, %v1238
        %v1245 = vmul.f32 %v1057, %v1238
        %v1246 = vmul.f32 %v1058, %v1238
        %v1247 = vmul.f32 %v1059, %v1238
        %v1248 = vmul.f32 %v1060, %v1238
        %v1249 = vmul.f32 %v1061, %v1238
        %v1250 = vmul.f32 %v1062, %v1238
        %v1251 = vmul.f32 %v1063, %v1238
        %v1252 = vmul.f32 %v1064, %v1238
        %v1253 = vmul.f32 %v1065, %v1238
        %v1254 = vmul.f32 %v1066, %v1238
        %v1255 = vmul.f32 %v1067, %v1238
        %v1256 = vmul.f32 %v1068, %v1238
        %v1257 = vmul.f32 %v1069, %v1238
        %v1258 = vmul.f32 %v1070, %v1238
        %v1259 = vmul.f32 %v1071, %v1238
        %v1260 = vmul.f32 %v1072, %v1238
        %v1261 = vmul.f32 %v1073, %v1238
        %v1262 = vmul.f32 %v1074, %v1238
        %v1287 = vrot.slane %v1239, 2
        %v1288 = vrot.slane %v1240, 2
        %v1289 = vsel %vm977, %v1287, %v1288
        %v1290 = vrot.slane %v1241, 2
        %v1291 = vsel %vm977, %v1288, %v1290
        %v1292 = vrot.slane %v1242, 2
        %v1293 = vrot.slane %v1243, 2
        %v1294 = vsel %vm977, %v1292, %v1293
        %v1295 = vrot.slane %v1244, 2
        %v1296 = vsel %vm977, %v1293, %v1295
        %v1297 = vrot.slane %v1245, 2
        %v1298 = vrot.slane %v1246, 2
        %v1299 = vsel %vm977, %v1297, %v1298
        %v1300 = vrot.slane %v1247, 2
        %v1301 = vsel %vm977, %v1298, %v1300
        %v1302 = vrot.slane %v1248, 2
        %v1303 = vrot.slane %v1249, 2
        %v1304 = vsel %vm977, %v1302, %v1303
        %v1305 = vrot.slane %v1250, 2
        %v1306 = vsel %vm977, %v1303, %v1305
        %v1307 = vrot.slane %v1251, 2
        %v1308 = vrot.slane %v1252, 2
        %v1309 = vsel %vm977, %v1307, %v1308
        %v1310 = vrot.slane %v1253, 2
        %v1311 = vsel %vm977, %v1308, %v1310
        %v1312 = vrot.slane %v1254, 2
        %v1313 = vrot.slane %v1255, 2
        %v1314 = vsel %vm977, %v1312, %v1313
        %v1315 = vrot.slane %v1256, 2
        %v1316 = vsel %vm977, %v1313, %v1315
        %v1317 = vrot.slane %v1257, 2
        %v1318 = vrot.slane %v1258, 2
        %v1319 = vsel %vm977, %v1317, %v1318
        %v1320 = vrot.slane %v1259, 2
        %v1321 = vsel %vm977, %v1318, %v1320
        %v1322 = vrot.slane %v1260, 2
        %v1323 = vrot.slane %v1261, 2
        %v1324 = vsel %vm977, %v1322, %v1323
        %v1325 = vrot.slane %v1262, 2
        %v1326 = vsel %vm977, %v1323, %v1325
        %v1343 = vadd.f32 %v1219, %v1289
        %v1344 = vadd.f32 %v1220, %v1291
        %v1345 = vadd.f32 %v1221, %v1294
        %v1346 = vadd.f32 %v1222, %v1296
        %v1347 = vadd.f32 %v1223, %v1299
        %v1348 = vadd.f32 %v1224, %v1301
        %v1349 = vadd.f32 %v1225, %v1304
        %v1350 = vadd.f32 %v1226, %v1306
        %v1351 = vadd.f32 %v1227, %v1309
        %v1352 = vadd.f32 %v1228, %v1311
        %v1353 = vadd.f32 %v1229, %v1314
        %v1354 = vadd.f32 %v1230, %v1316
        %v1355 = vadd.f32 %v1231, %v1319
        %v1356 = vadd.f32 %v1232, %v1321
        %v1357 = vadd.f32 %v1233, %v1324
        %v1358 = vadd.f32 %v1234, %v1326
        %s1359 = scalar_lea.vmem [#allocation2], 48
        %v1360 = vld [vmem:[%s1359] sm:$0xff]
        %v1361 = vld [vmem:[%s1359 + $0x8] sm:$0xff]
        %v1362 = vld [vmem:[%s1359 + $0x10] sm:$0xff]
        %v1363 = vld [vmem:[%s1359 + $0x18] sm:$0xff]
        %v1364 = vld [vmem:[%s1359 + $0x20] sm:$0xff]
        %v1365 = vld [vmem:[%s1359 + $0x28] sm:$0xff]
        %v1366 = vld [vmem:[%s1359 + $0x30] sm:$0xff]
        %v1367 = vld [vmem:[%s1359 + $0x38] sm:$0xff]
        %v1368 = vld [vmem:[%s1359 + $0x40] sm:$0xff]
        %v1369 = vld [vmem:[%s1359 + $0x48] sm:$0xff]
        %v1370 = vld [vmem:[%s1359 + $0x50] sm:$0xff]
        %v1371 = vld [vmem:[%s1359 + $0x58] sm:$0xff]
        %v1372 = vld [vmem:[%s1359 + $0x60] sm:$0xff]
        %v1373 = vld [vmem:[%s1359 + $0x68] sm:$0xff]
        %v1374 = vld [vmem:[%s1359 + $0x70] sm:$0xff]
        %v1375 = vld [vmem:[%s1359 + $0x78] sm:$0xff]
        %v1376 = vld [vmem:[%s1359 + $0x80] sm:$0xff]
        %v1377 = vld [vmem:[%s1359 + $0x88] sm:$0xff]
        %v1378 = vld [vmem:[%s1359 + $0x90] sm:$0xff]
        %v1379 = vld [vmem:[%s1359 + $0x98] sm:$0xff]
        %v1380 = vld [vmem:[%s1359 + $0xa0] sm:$0xff]
        %v1381 = vld [vmem:[%s1359 + $0xa8] sm:$0xff]
        %v1382 = vld [vmem:[%s1359 + $0xb0] sm:$0xff]
        %v1383 = vld [vmem:[%s1359 + $0xb8] sm:$0xff]
        %v1384 = vlaneseq
        %v1385 = vshrl.u32 %v1384, 7
        %v1386 = vsub.s32 6, %v1385
        %v1387 = vrot.slane %v754, %v1386
        %v1388 = vmul.f32 %v1360, %v1387
        %v1389 = vmul.f32 %v1361, %v1387
        %v1390 = vmul.f32 %v1363, %v1387
        %v1391 = vmul.f32 %v1364, %v1387
        %v1392 = vmul.f32 %v1366, %v1387
        %v1393 = vmul.f32 %v1367, %v1387
        %v1394 = vmul.f32 %v1369, %v1387
        %v1395 = vmul.f32 %v1370, %v1387
        %v1396 = vmul.f32 %v1372, %v1387
        %v1397 = vmul.f32 %v1373, %v1387
        %v1398 = vmul.f32 %v1375, %v1387
        %v1399 = vmul.f32 %v1376, %v1387
        %v1400 = vmul.f32 %v1378, %v1387
        %v1401 = vmul.f32 %v1379, %v1387
        %v1402 = vmul.f32 %v1381, %v1387
        %v1403 = vmul.f32 %v1382, %v1387
        %v1404 = vadd.f32 %v1343, %v1388
        %v1405 = vadd.f32 %v1344, %v1389
        %v1406 = vadd.f32 %v1345, %v1390
        %v1407 = vadd.f32 %v1346, %v1391
        %v1408 = vadd.f32 %v1347, %v1392
        %v1409 = vadd.f32 %v1348, %v1393
        %v1410 = vadd.f32 %v1349, %v1394
        %v1411 = vadd.f32 %v1350, %v1395
        %v1412 = vadd.f32 %v1351, %v1396
        %v1413 = vadd.f32 %v1352, %v1397
        %v1414 = vadd.f32 %v1353, %v1398
        %v1415 = vadd.f32 %v1354, %v1399
        %v1416 = vadd.f32 %v1355, %v1400
        %v1417 = vadd.f32 %v1356, %v1401
        %v1418 = vadd.f32 %v1357, %v1402
        %v1419 = vadd.f32 %v1358, %v1403
        %v1420 = vlaneseq
        %v1421 = vshrl.u32 %v1420, 7
        %v1422 = vsub.s32 7, %v1421
        %v1423 = vrot.slane %v754, %v1422
        %v1424 = vmul.f32 %v1360, %v1423
        %v1425 = vmul.f32 %v1361, %v1423
        %v1426 = vmul.f32 %v1362, %v1423
        %v1427 = vmul.f32 %v1363, %v1423
        %v1428 = vmul.f32 %v1364, %v1423
        %v1429 = vmul.f32 %v1365, %v1423
        %v1430 = vmul.f32 %v1366, %v1423
        %v1431 = vmul.f32 %v1367, %v1423
        %v1432 = vmul.f32 %v1368, %v1423
        %v1433 = vmul.f32 %v1369, %v1423
        %v1434 = vmul.f32 %v1370, %v1423
        %v1435 = vmul.f32 %v1371, %v1423
        %v1436 = vmul.f32 %v1372, %v1423
        %v1437 = vmul.f32 %v1373, %v1423
        %v1438 = vmul.f32 %v1374, %v1423
        %v1439 = vmul.f32 %v1375, %v1423
        %v1440 = vmul.f32 %v1376, %v1423
        %v1441 = vmul.f32 %v1377, %v1423
        %v1442 = vmul.f32 %v1378, %v1423
        %v1443 = vmul.f32 %v1379, %v1423
        %v1444 = vmul.f32 %v1380, %v1423
        %v1445 = vmul.f32 %v1381, %v1423
        %v1446 = vmul.f32 %v1382, %v1423
        %v1447 = vmul.f32 %v1383, %v1423
        %v1472 = vrot.slane %v1424, 1
        %v1473 = vrot.slane %v1425, 1
        %v1474 = vsel %vm852, %v1472, %v1473
        %v1475 = vrot.slane %v1426, 1
        %v1476 = vsel %vm852, %v1473, %v1475
        %v1477 = vrot.slane %v1427, 1
        %v1478 = vrot.slane %v1428, 1
        %v1479 = vsel %vm852, %v1477, %v1478
        %v1480 = vrot.slane %v1429, 1
        %v1481 = vsel %vm852, %v1478, %v1480
        %v1482 = vrot.slane %v1430, 1
        %v1483 = vrot.slane %v1431, 1
        %v1484 = vsel %vm852, %v1482, %v1483
        %v1485 = vrot.slane %v1432, 1
        %v1486 = vsel %vm852, %v1483, %v1485
        %v1487 = vrot.slane %v1433, 1
        %v1488 = vrot.slane %v1434, 1
        %v1489 = vsel %vm852, %v1487, %v1488
        %v1490 = vrot.slane %v1435, 1
        %v1491 = vsel %vm852, %v1488, %v1490
        %v1492 = vrot.slane %v1436, 1
        %v1493 = vrot.slane %v1437, 1
        %v1494 = vsel %vm852, %v1492, %v1493
        %v1495 = vrot.slane %v1438, 1
        %v1496 = vsel %vm852, %v1493, %v1495
        %v1497 = vrot.slane %v1439, 1
        %v1498 = vrot.slane %v1440, 1
        %v1499 = vsel %vm852, %v1497, %v1498
        %v1500 = vrot.slane %v1441, 1
        %v1501 = vsel %vm852, %v1498, %v1500
        %v1502 = vrot.slane %v1442, 1
        %v1503 = vrot.slane %v1443, 1
        %v1504 = vsel %vm852, %v1502, %v1503
        %v1505 = vrot.slane %v1444, 1
        %v1506 = vsel %vm852, %v1503, %v1505
        %v1507 = vrot.slane %v1445, 1
        %v1508 = vrot.slane %v1446, 1
        %v1509 = vsel %vm852, %v1507, %v1508
        %v1510 = vrot.slane %v1447, 1
        %v1511 = vsel %vm852, %v1508, %v1510
        %v1528 = vadd.f32 %v1404, %v1474
        %v1529 = vadd.f32 %v1405, %v1476
        %v1530 = vadd.f32 %v1406, %v1479
        %v1531 = vadd.f32 %v1407, %v1481
        %v1532 = vadd.f32 %v1408, %v1484
        %v1533 = vadd.f32 %v1409, %v1486
        %v1534 = vadd.f32 %v1410, %v1489
        %v1535 = vadd.f32 %v1411, %v1491
        %v1536 = vadd.f32 %v1412, %v1494
        %v1537 = vadd.f32 %v1413, %v1496
        %v1538 = vadd.f32 %v1414, %v1499
        %v1539 = vadd.f32 %v1415, %v1501
        %v1540 = vadd.f32 %v1416, %v1504
        %v1541 = vadd.f32 %v1417, %v1506
        %v1542 = vadd.f32 %v1418, %v1509
        %v1543 = vadd.f32 %v1419, %v1511
        %v1544 = vlaneseq
        %v1545 = vshrl.u32 %v1544, 7
        %v1546 = vsub.s32 0, %v1545
        %v1547 = vrot.slane %v755, %v1546
        %v1548 = vmul.f32 %v1360, %v1547
        %v1549 = vmul.f32 %v1361, %v1547
        %v1550 = vmul.f32 %v1362, %v1547
        %v1551 = vmul.f32 %v1363, %v1547
        %v1552 = vmul.f32 %v1364, %v1547
        %v1553 = vmul.f32 %v1365, %v1547
        %v1554 = vmul.f32 %v1366, %v1547
        %v1555 = vmul.f32 %v1367, %v1547
        %v1556 = vmul.f32 %v1368, %v1547
        %v1557 = vmul.f32 %v1369, %v1547
        %v1558 = vmul.f32 %v1370, %v1547
        %v1559 = vmul.f32 %v1371, %v1547
        %v1560 = vmul.f32 %v1372, %v1547
        %v1561 = vmul.f32 %v1373, %v1547
        %v1562 = vmul.f32 %v1374, %v1547
        %v1563 = vmul.f32 %v1375, %v1547
        %v1564 = vmul.f32 %v1376, %v1547
        %v1565 = vmul.f32 %v1377, %v1547
        %v1566 = vmul.f32 %v1378, %v1547
        %v1567 = vmul.f32 %v1379, %v1547
        %v1568 = vmul.f32 %v1380, %v1547
        %v1569 = vmul.f32 %v1381, %v1547
        %v1570 = vmul.f32 %v1382, %v1547
        %v1571 = vmul.f32 %v1383, %v1547
        %v1596 = vrot.slane %v1548, 2
        %v1597 = vrot.slane %v1549, 2
        %v1598 = vsel %vm977, %v1596, %v1597
        %v1599 = vrot.slane %v1550, 2
        %v1600 = vsel %vm977, %v1597, %v1599
        %v1601 = vrot.slane %v1551, 2
        %v1602 = vrot.slane %v1552, 2
        %v1603 = vsel %vm977, %v1601, %v1602
        %v1604 = vrot.slane %v1553, 2
        %v1605 = vsel %vm977, %v1602, %v1604
        %v1606 = vrot.slane %v1554, 2
        %v1607 = vrot.slane %v1555, 2
        %v1608 = vsel %vm977, %v1606, %v1607
        %v1609 = vrot.slane %v1556, 2
        %v1610 = vsel %vm977, %v1607, %v1609
        %v1611 = vrot.slane %v1557, 2
        %v1612 = vrot.slane %v1558, 2
        %v1613 = vsel %vm977, %v1611, %v1612
        %v1614 = vrot.slane %v1559, 2
        %v1615 = vsel %vm977, %v1612, %v1614
        %v1616 = vrot.slane %v1560, 2
        %v1617 = vrot.slane %v1561, 2
        %v1618 = vsel %vm977, %v1616, %v1617
        %v1619 = vrot.slane %v1562, 2
        %v1620 = vsel %vm977, %v1617, %v1619
        %v1621 = vrot.slane %v1563, 2
        %v1622 = vrot.slane %v1564, 2
        %v1623 = vsel %vm977, %v1621, %v1622
        %v1624 = vrot.slane %v1565, 2
        %v1625 = vsel %vm977, %v1622, %v1624
        %v1626 = vrot.slane %v1566, 2
        %v1627 = vrot.slane %v1567, 2
        %v1628 = vsel %vm977, %v1626, %v1627
        %v1629 = vrot.slane %v1568, 2
        %v1630 = vsel %vm977, %v1627, %v1629
        %v1631 = vrot.slane %v1569, 2
        %v1632 = vrot.slane %v1570, 2
        %v1633 = vsel %vm977, %v1631, %v1632
        %v1634 = vrot.slane %v1571, 2
        %v1635 = vsel %vm977, %v1632, %v1634
        %v1652 = vadd.f32 %v1528, %v1598
        %v1653 = vadd.f32 %v1529, %v1600
        %v1654 = vadd.f32 %v1530, %v1603
        %v1655 = vadd.f32 %v1531, %v1605
        %v1656 = vadd.f32 %v1532, %v1608
        %v1657 = vadd.f32 %v1533, %v1610
        %v1658 = vadd.f32 %v1534, %v1613
        %v1659 = vadd.f32 %v1535, %v1615
        %v1660 = vadd.f32 %v1536, %v1618
        %v1661 = vadd.f32 %v1537, %v1620
        %v1662 = vadd.f32 %v1538, %v1623
        %v1663 = vadd.f32 %v1539, %v1625
        %v1664 = vadd.f32 %v1540, %v1628
        %v1665 = vadd.f32 %v1541, %v1630
        %v1666 = vadd.f32 %v1542, %v1633
        %v1667 = vadd.f32 %v1543, %v1635
        %v1668 = vld [vmem:[%s4] sm:$0x1]
        %v1670 = vlaneseq
        %v1671 = vshrl.u32 %v1670, 7
        %v1672 = vsub.s32 0, %v1671
        %v1673 = vrot.slane %v1668, %v1672
        %v1675 = vadd.f32 %v1652, %v1673
        %v1676 = vadd.f32 %v1653, %v1673
        %v1677 = vadd.f32 %v1654, %v1673
        %v1678 = vadd.f32 %v1655, %v1673
        %v1679 = vadd.f32 %v1656, %v1673
        %v1680 = vadd.f32 %v1657, %v1673
        %v1681 = vadd.f32 %v1658, %v1673
        %v1682 = vadd.f32 %v1659, %v1673
        %v1683 = vadd.f32 %v1660, %v1673
        %v1684 = vadd.f32 %v1661, %v1673
        %v1685 = vadd.f32 %v1662, %v1673
        %v1686 = vadd.f32 %v1663, %v1673
        %v1687 = vadd.f32 %v1664, %v1673
        %v1688 = vadd.f32 %v1665, %v1673
        %v1689 = vadd.f32 %v1666, %v1673
        %v1690 = vadd.f32 %v1667, %v1673
        %v1691 = vmax.f32 %v1675, 0.0
        %v1692 = vmax.f32 %v1676, 0.0
        %v1693 = vmax.f32 %v1677, 0.0
        %v1694 = vmax.f32 %v1678, 0.0
        %v1695 = vmax.f32 %v1679, 0.0
        %v1696 = vmax.f32 %v1680, 0.0
        %v1697 = vmax.f32 %v1681, 0.0
        %v1698 = vmax.f32 %v1682, 0.0
        %v1699 = vmax.f32 %v1683, 0.0
        %v1700 = vmax.f32 %v1684, 0.0
        %v1701 = vmax.f32 %v1685, 0.0
        %v1702 = vmax.f32 %v1686, 0.0
        %v1703 = vmax.f32 %v1687, 0.0
        %v1704 = vmax.f32 %v1688, 0.0
        %v1705 = vmax.f32 %v1689, 0.0
        %v1706 = vmax.f32 %v1690, 0.0
        %v1707 = vmin.f32 %v1691, 6.0
        %v1708 = vmin.f32 %v1692, 6.0
        %v1709 = vmin.f32 %v1693, 6.0
        %v1710 = vmin.f32 %v1694, 6.0
        %v1711 = vmin.f32 %v1695, 6.0
        %v1712 = vmin.f32 %v1696, 6.0
        %v1713 = vmin.f32 %v1697, 6.0
        %v1714 = vmin.f32 %v1698, 6.0
        %v1715 = vmin.f32 %v1699, 6.0
        %v1716 = vmin.f32 %v1700, 6.0
        %v1717 = vmin.f32 %v1701, 6.0
        %v1718 = vmin.f32 %v1702, 6.0
        %v1719 = vmin.f32 %v1703, 6.0
        %v1720 = vmin.f32 %v1704, 6.0
        %v1721 = vmin.f32 %v1705, 6.0
        %v1722 = vmin.f32 %v1706, 6.0
        %v1723 = vpack.c.bf16 %v1708, %v1707
        %v1724 = vpack.c.bf16 %v1710, %v1709
        %v1725 = vpack.c.bf16 %v1712, %v1711
        %v1726 = vpack.c.bf16 %v1714, %v1713
        %v1727 = vpack.c.bf16 %v1716, %v1715
        %v1728 = vpack.c.bf16 %v1718, %v1717
        %v1729 = vpack.c.bf16 %v1720, %v1719
        %v1730 = vpack.c.bf16 %v1722, %v1721
        %v1731 = vld [vmem:[#allocation9] sm:$0xf]
        %v1732 = vld [vmem:[#allocation9 + $0x4] sm:$0xf]
        %v1733 = vld [vmem:[#allocation9 + $0x8] sm:$0xf]
        %v1734 = vld [vmem:[#allocation9 + $0xc] sm:$0xf]
        %v1735 = vld [vmem:[#allocation9 + $0x10] sm:$0xf]
        %v1736 = vld [vmem:[#allocation9 + $0x14] sm:$0xf]
        %v1737 = vld [vmem:[#allocation9 + $0x18] sm:$0xf]
        %v1738 = vld [vmem:[#allocation9 + $0x1c] sm:$0xf]
        %v1739 = vld [vmem:[#allocation9 + $0x20] sm:$0xf]
        %v1740 = vld [vmem:[#allocation9 + $0x24] sm:$0xf]
        %v1741 = vld [vmem:[#allocation9 + $0x28] sm:$0xf]
        %v1742 = vld [vmem:[#allocation9 + $0x2c] sm:$0xf]
        %v1743 = vld [vmem:[#allocation9 + $0x30] sm:$0xf]
        %v1744 = vld [vmem:[#allocation9 + $0x34] sm:$0xf]
        %v1745 = vld [vmem:[#allocation9 + $0x38] sm:$0xf]
        %v1746 = vld [vmem:[#allocation9 + $0x3c] sm:$0xf]
        %v1747 = vld [vmem:[%s6] sm:$0x1]
        %v1749 = vlaneseq
        %v1750 = vshrl.u32 %v1749, 7
        %v1751 = vsub.s32 0, %v1750
        %v1752 = vrot.slane %v1747, %v1751
        %v1770 = vunpack.c.l.b16 %v1731
        %v1771 = vunpack.c.l.b16 %v1732
        %v1772 = vunpack.c.l.b16 %v1733
        %v1773 = vunpack.c.l.b16 %v1734
        %v1774 = vunpack.c.l.b16 %v1735
        %v1775 = vunpack.c.l.b16 %v1736
        %v1776 = vunpack.c.l.b16 %v1737
        %v1777 = vunpack.c.l.b16 %v1738
        %v1778 = vunpack.c.l.b16 %v1739
        %v1779 = vunpack.c.l.b16 %v1740
        %v1780 = vunpack.c.l.b16 %v1741
        %v1781 = vunpack.c.l.b16 %v1742
        %v1782 = vunpack.c.l.b16 %v1743
        %v1783 = vunpack.c.l.b16 %v1744
        %v1784 = vunpack.c.l.b16 %v1745
        %v1785 = vunpack.c.l.b16 %v1746
        %v1786 = vpack.c.b16 %v1771, %v1770
        %v1787 = vpack.c.b16 %v1773, %v1772
        %v1788 = vpack.c.b16 %v1775, %v1774
        %v1789 = vpack.c.b16 %v1777, %v1776
        %v1790 = vpack.c.b16 %v1779, %v1778
        %v1791 = vpack.c.b16 %v1781, %v1780
        %v1792 = vpack.c.b16 %v1783, %v1782
        %v1793 = vpack.c.b16 %v1785, %v1784
        %1802 = vmatprep.subr.bf16.mxu0 0
        %1803 = vmatpush1.bf16.msra.mxu0 %v1786
        %1804 = vmatprep.subr.bf16.mxu0 0
        %1805 = vmatpush1.bf16.msra.mxu0 %v1787
        %1806 = vmatprep.subr.bf16.mxu0 0
        %1807 = vmatpush1.bf16.msra.mxu0 %v1788
        %1808 = vmatprep.subr.bf16.mxu0 0
        %1809 = vmatpush1.bf16.msra.mxu0 %v1789
        %1810 = vmatprep.subr.bf16.mxu0 0
        %1811 = vmatpush1.bf16.msra.mxu0 %v1790
        %1812 = vmatprep.subr.bf16.mxu0 0
        %1813 = vmatpush1.bf16.msra.mxu0 %v1791
        %1814 = vmatprep.subr.bf16.mxu0 0
        %1815 = vmatpush1.bf16.msra.mxu0 %v1792
        %1816 = vmatprep.subr.bf16.mxu0 0
        %1817 = vmatpush1.bf16.msra.mxu0 %v1793
        %1818 = vmatprep.subr.bf16.mxu0 0
        %1819 = vmatpush1.bf16.msra.mxu0 0
        %1820 = vmatprep.subr.bf16.mxu0 0
        %1821 = vmatpush1.bf16.msra.mxu0 0
        %1822 = vmatprep.subr.bf16.mxu0 0
        %1823 = vmatpush1.bf16.msra.mxu0 0
        %1824 = vmatprep.subr.bf16.mxu0 0
        %1825 = vmatpush1.bf16.msra.mxu0 0
        %1826 = vmatprep.subr.bf16.mxu0 0
        %1827 = vmatpush1.bf16.msra.mxu0 0
        %1828 = vmatprep.subr.bf16.mxu0 0
        %1829 = vmatpush1.bf16.msra.mxu0 0
        %1830 = vmatprep.subr.bf16.mxu0 0
        %1831 = vmatpush1.bf16.msra.mxu0 0
        %1832 = vmatprep.subr.bf16.mxu0 0
        %1833 = vmatpush1.bf16.msra.mxu0 0
        %1834 = vmatprep.mubr.bf16.mxu0 0
        %1835 = vmatmul.mubr.bf16.gmra.mrb[0].mxu0 %v1723
        %v1836 = vpop.f32.mrb[0].mxu0
        %v1837 = vadd.f32 %v1752, %v1836
        %v1838 = vpop.f32.mrb[0].mxu0
        %v1839 = vpop.f32.mrb[0].mxu0
        %v1840 = vadd.f32 %v1752, %v1839
        %v1841 = vpop.f32.mrb[0].mxu0
        %1842 = vmatprep.mubr.bf16.mxu0 0
        %1843 = vmatmul.mubr.bf16.gmra.mrb[0].mxu0 %v1724
        %v1844 = vpop.f32.mrb[0].mxu0
        %v1845 = vadd.f32 %v1752, %v1844
        %v1846 = vpop.f32.mrb[0].mxu0
        %v1847 = vpop.f32.mrb[0].mxu0
        %v1848 = vadd.f32 %v1752, %v1847
        %v1849 = vpop.f32.mrb[0].mxu0
        %1850 = vmatprep.mubr.bf16.mxu0 0
        %1851 = vmatmul.mubr.bf16.gmra.mrb[0].mxu0 %v1725
        %v1852 = vpop.f32.mrb[0].mxu0
        %v1853 = vadd.f32 %v1752, %v1852
        %v1854 = vpop.f32.mrb[0].mxu0
        %v1855 = vpop.f32.mrb[0].mxu0
        %v1856 = vadd.f32 %v1752, %v1855
        %v1857 = vpop.f32.mrb[0].mxu0
        %1858 = vmatprep.mubr.bf16.mxu0 0
        %1859 = vmatmul.mubr.bf16.gmra.mrb[0].mxu0 %v1726
        %v1860 = vpop.f32.mrb[0].mxu0
        %v1861 = vadd.f32 %v1752, %v1860
        %v1862 = vpop.f32.mrb[0].mxu0
        %v1863 = vpop.f32.mrb[0].mxu0
        %v1864 = vadd.f32 %v1752, %v1863
        %v1865 = vpop.f32.mrb[0].mxu0
        %1866 = vmatprep.mubr.bf16.mxu0 0
        %1867 = vmatmul.mubr.bf16.gmra.mrb[0].mxu0 %v1727
        %v1868 = vpop.f32.mrb[0].mxu0
        %v1869 = vadd.f32 %v1752, %v1868
        %v1870 = vpop.f32.mrb[0].mxu0
        %v1871 = vpop.f32.mrb[0].mxu0
        %v1872 = vadd.f32 %v1752, %v1871
        %v1873 = vpop.f32.mrb[0].mxu0
        %1874 = vmatprep.mubr.bf16.mxu0 0
        %1875 = vmatmul.mubr.bf16.gmra.mrb[0].mxu0 %v1728
        %v1876 = vpop.f32.mrb[0].mxu0
        %v1877 = vadd.f32 %v1752, %v1876
        %v1878 = vpop.f32.mrb[0].mxu0
        %v1879 = vpop.f32.mrb[0].mxu0
        %v1880 = vadd.f32 %v1752, %v1879
        %v1881 = vpop.f32.mrb[0].mxu0
        %1882 = vmatprep.mubr.bf16.mxu0 0
        %1883 = vmatmul.mubr.bf16.gmra.mrb[0].mxu0 %v1729
        %v1884 = vpop.f32.mrb[0].mxu0
        %v1885 = vadd.f32 %v1752, %v1884
        %v1886 = vpop.f32.mrb[0].mxu0
        %v1887 = vpop.f32.mrb[0].mxu0
        %v1888 = vadd.f32 %v1752, %v1887
        %v1889 = vpop.f32.mrb[0].mxu0
        %1890 = vmatprep.mubr.bf16.mxu0 0
        %1891 = vmatmul.mubr.bf16.gmra.mrb[0].mxu0 %v1730
        %v1892 = vpop.f32.mrb[0].mxu0
        %v1893 = vadd.f32 %v1752, %v1892
        %v1894 = vpop.f32.mrb[0].mxu0
        %v1895 = vpop.f32.mrb[0].mxu0
        %v1896 = vadd.f32 %v1752, %v1895
        %v1897 = vpop.f32.mrb[0].mxu0
        %1898 = vdwg.mxu0
        %s1899 = sadd.s32 %s357, 1
        %s1900 = smul.u32 %s1899, 24
        %s1901 = scalar_lea.vmem %s312, %s1900 [#allocation3]
        %v1902 = vld [vmem:[%s1901 + $0x1] sm:$0xff]
        %v1903 = vld [vmem:[%s1901 + $0x9] sm:$0xff]
        %v1904 = vld [vmem:[%s1901 + $0x19] sm:$0xff]
        %v1905 = vld [vmem:[%s1901 + $0x21] sm:$0xff]
        %v1906 = vld [vmem:[%s1901 + $0x31] sm:$0xff]
        %v1907 = vld [vmem:[%s1901 + $0x39] sm:$0xff]
        %v1908 = vld [vmem:[%s1901 + $0x49] sm:$0xff]
        %v1909 = vld [vmem:[%s1901 + $0x51] sm:$0xff]
        %v1910 = vld [vmem:[%s1901 + $0x61] sm:$0xff]
        %v1911 = vld [vmem:[%s1901 + $0x69] sm:$0xff]
        %v1912 = vld [vmem:[%s1901 + $0x79] sm:$0xff]
        %v1913 = vld [vmem:[%s1901 + $0x81] sm:$0xff]
        %v1914 = vld [vmem:[%s1901 + $0x91] sm:$0xff]
        %v1915 = vld [vmem:[%s1901 + $0x99] sm:$0xff]
        %v1916 = vld [vmem:[%s1901 + $0xa9] sm:$0xff]
        %v1917 = vld [vmem:[%s1901 + $0xb1] sm:$0xff]
        %v1918 = vadd.f32 %v1837, %v1902
        %v1919 = vadd.f32 %v1840, %v1903
        %v1920 = vadd.f32 %v1845, %v1904
        %v1921 = vadd.f32 %v1848, %v1905
        %v1922 = vadd.f32 %v1853, %v1906
        %v1923 = vadd.f32 %v1856, %v1907
        %v1924 = vadd.f32 %v1861, %v1908
        %v1925 = vadd.f32 %v1864, %v1909
        %v1926 = vadd.f32 %v1869, %v1910
        %v1927 = vadd.f32 %v1872, %v1911
        %v1928 = vadd.f32 %v1877, %v1912
        %v1929 = vadd.f32 %v1880, %v1913
        %v1930 = vadd.f32 %v1885, %v1914
        %v1931 = vadd.f32 %v1888, %v1915
        %v1932 = vadd.f32 %v1893, %v1916
        %v1933 = vadd.f32 %v1896, %v1917
        %1934 = vst [vmem:[%s354] sm:$0xff] %v1918
        %1935 = vst [vmem:[%s354 + $0x8] sm:$0xff] %v1919
        %1936 = vst [vmem:[%s354 + $0x10] sm:$0xff] %v1920
        %1937 = vst [vmem:[%s354 + $0x18] sm:$0xff] %v1921
        %1938 = vst [vmem:[%s354 + $0x20] sm:$0xff] %v1922
        %1939 = vst [vmem:[%s354 + $0x28] sm:$0xff] %v1923
        %1940 = vst [vmem:[%s354 + $0x30] sm:$0xff] %v1924
        %1941 = vst [vmem:[%s354 + $0x38] sm:$0xff] %v1925
        %1942 = vst [vmem:[%s354 + $0x40] sm:$0xff] %v1926
        %1943 = vst [vmem:[%s354 + $0x48] sm:$0xff] %v1927
        %1944 = vst [vmem:[%s354 + $0x50] sm:$0xff] %v1928
        %1945 = vst [vmem:[%s354 + $0x58] sm:$0xff] %v1929
        %1946 = vst [vmem:[%s354 + $0x60] sm:$0xff] %v1930
        %1947 = vst [vmem:[%s354 + $0x68] sm:$0xff] %v1931
        %1948 = vst [vmem:[%s354 + $0x70] sm:$0xff] %v1932
        %1949 = vst [vmem:[%s354 + $0x78] sm:$0xff] %v1933
        %s1950 = sand.u32 %s200, 1
        %s1951 = scalar_lea.sflag [#allocation5], %s1950
        %s1952 = sand.u32 %s200, 1
        %s1953 = smul.addr %s1952, 128
        %s1954 = scalar_lea.vmem [#allocation11], %s1953
        // Predicated region
        $region73: #{tpu_custom_call.1} parent=47 // pred_check
          %p1955 = pneg %p210
        $region74: #{tpu_custom_call.1} parent=47 // pred_check_branch
          %1957 = sbr.rel (%p1955) target = $region76
        $region75: #{tpu_custom_call.1} parent=47 // pred_region
          %s1958 = smul.u32 8, %s31
          %s1960 = ssub.s32 2048, 2048
          %1961 = vsyncadd %s1951, %s1960
          %s1962 = smul.addr %s1958, 2
          %s1963 = smul.addr %s30, 32
          %s1964 = sadd.s32 %s1962, %s1963
          %s1965 = smul.addr %s1964, 128
          %s1966 = scalar_lea.hbm %s7, %s1965
          %s1967 = sshll.u32 %s1954, 4
          %s1968 = int_to_ptr.vmem [resolvable:$true] %s1967
          %1973 = dma.vmem_to_hbm [thread:$0]  %s1968, 2048, %s1966, %s1951, 128, 128, 8
        $region76: #{tpu_custom_call.1} parent=47 // pred_fallthru
          _
      $region48: #{tpu_custom_call.1} parent=5 // pred_fallthru
        _
      %p1974 = scmp.le.s32.totalorder 2, %s21
      // Predicated region
      $region77: #{tpu_custom_call.1} parent=5 // pred_check
        %p1975 = pneg %p1974
      $region78: #{tpu_custom_call.1} parent=5 // pred_check_branch
        %1977 = sbr.rel (%p1975) target = $region80
      $region79: #{tpu_custom_call.1} parent=5 // pred_region
        %s1978 = ssub.s32 %s21, 2
        // Predicated region
        $region81: #{tpu_custom_call.1} parent=79 // pred_check
          %p1979 = pneg %p216
        $region82: #{tpu_custom_call.1} parent=79 // pred_check_branch
          %1981 = sbr.rel (%p1979) target = $region84
        $region83: #{tpu_custom_call.1} parent=79 // pred_region
          %s1982 = sand.u32 %s201, 1
          %s1983 = scalar_lea.sflag [#allocation5], %s1982
          %s1984 = sand.u32 %s201, 1
          %s1985 = smul.addr %s1984, 128
          %s1986 = scalar_lea.vmem [#allocation11], %s1985
          %1987 = dma.done %s1983, 2048
        $region84: #{tpu_custom_call.1} parent=79 // pred_fallthru
          _
      $region80: #{tpu_custom_call.1} parent=5 // pred_fallthru
        _
    $region6: #{tpu_custom_call.1} parent=1 // loop_footer
      %s25 = sadd.s32 1, %s21
    $region7: #{tpu_custom_call.1} parent=1 // loop_footer_branch
      %20 = sbr.rel target = $region3
    $region8: #{tpu_custom_call.1} parent=1 // loop_exit
      _
    %1988 = vsyncpa [#allocation4], 1
    %s1989 = scalar_lea.sflag [#allocation4], 1
    %1990 = vsyncpa %s1989, 1
    %1991 = vsyncpa [#allocation7], 1
    %1992 = vsyncpa [#allocation10], 1
    %1993 = vsyncpa [#allocation5], 1
    %s1994 = scalar_lea.sflag [#allocation5], 1
    %1995 = vsyncpa %s1994, 1

</llo_original>
